<compile_context>
chip_gen: v5e
topology: v5e:2x2
jax: 0.10.0
libtpu: 0.0.40
codegen_flags: <defaults>
</compile_context>

<pallas_src>
import jax
import jax.numpy as jnp
import numpy as np
from jax.experimental import pallas as pl
from jax.experimental.pallas import tpu as pltpu

_MAX_BATCH_TILE = 256   # rows per grid step when many states are batched


# ----------------------------- Pallas kernel --------------------------------

def actor_forward_kernel(x_ref, toep_ref, bconv_ref, wfc_ref, bfc_ref,
                         wout_ref, bout_ref, out_ref):
    """x_ref: [3, TB, L] f32.  toep/wfc/wout: bf16 weights.  biases: f32."""
    tb = x_ref.shape[1]
    layer2 = bfc_ref.shape[1]
    h = jnp.zeros((tb, layer2), jnp.float32)
    for br in range(3):                                   # unrolled: 3 branches
        xb = x_ref[br].astype(jnp.bfloat16)               # [TB, L]
        # Conv1d as a Toeplitz matmul; columns ordered (out_channel, time),
        # exactly torch's view(B, -1) flatten of the [B, C1, T] conv output.
        conv = jnp.dot(xb, toep_ref[br],
                       preferred_element_type=jnp.float32)            # [TB, C1*T]
        conv = jnp.maximum(conv + bconv_ref[pl.ds(br, 1), :], 0.0)     # bias+ReLU (f32)
        # This branch's rows of the fc layer, accumulated in f32 (== fc on the
        # concatenation of the three flattened branches).
        h = h + jnp.dot(conv.astype(jnp.bfloat16), wfc_ref[br],
                        preferred_element_type=jnp.float32)            # [TB, layer2]
    h = jnp.maximum(h + bfc_ref[...], 0.0)                             # fc ReLU (f32)
    logits = jnp.dot(h.astype(jnp.bfloat16), wout_ref[...],
                     preferred_element_type=jnp.float32) + bout_ref[...]
    m = jnp.max(logits, axis=-1, keepdims=True)
    e = jnp.exp(logits - m)
    denom = jnp.sum(e, axis=-1, keepdims=True)
    out_ref[...] = (e * pl.reciprocal(denom, approx=True)).astype(out_ref.dtype)


# ----------------------- one-time parameter preprocessing --------------------

def prepare_params(params, state_length):
    """Hoisted, numpy-only prep of PyTorch-layout weights (zero per-call cost)."""
    L, K = state_length, 3
    T = L - K + 1
    names = ("rConv1d", "dConv1d", "lConv1d")
    ws = [np.asarray(params[n + ".w"], np.float32) for n in names]   # [C1, 1, 3]
    bs = [np.asarray(params[n + ".b"], np.float32) for n in names]   # [C1]
    C1 = ws[0].shape[0]

    # Per-branch Toeplitz: toep[br, t+k, c*T + t] = w_br[c, 0, k]
    toep = np.zeros((3, L, C1 * T), np.float32)
    cols = np.arange(C1) * T
    for br in range(3):
        for t in range(T):
            for k in range(K):
                toep[br, t + k, cols + t] = ws[br][:, 0, k]
    bconv = np.stack([np.repeat(b, T) for b in bs])                   # [3, C1*T]

    wfc = np.asarray(params["fc.w"], np.float32)                      # [layer2, 3*C1*T]
    layer2 = wfc.shape[0]
    assert wfc.shape[1] == 3 * C1 * T, \
        "layer1_shape * (state_length - 2) * 3 must equal numFcInput"
    wfc_t = np.ascontiguousarray(wfc.T).reshape(3, C1 * T, layer2)    # per-branch rows
    wout_t = np.ascontiguousarray(
        np.asarray(params["actor_output.w"], np.float32).T)          # [layer2, a_dim]

    return dict(
        toep=jnp.asarray(toep, jnp.bfloat16),
        bconv=jnp.asarray(bconv, jnp.float32),
        wfc=jnp.asarray(wfc_t, jnp.bfloat16),
        bfc=jnp.asarray(np.asarray(params["fc.b"], np.float32)[None, :]),
        wout=jnp.asarray(wout_t, jnp.bfloat16),
        bout=jnp.asarray(np.asarray(params["actor_output.b"], np.float32)[None, :]),
    )


# ------------------------------ forward wrapper -------------------------------

def _pallas_actor_call(x3, prepped):
    """x3: [3, B_pad, L] f32 with B_pad a multiple of the batch tile."""
    _, b_pad, L = x3.shape
    toep, bconv = prepped["toep"], prepped["bconv"]
    wfc, bfc = prepped["wfc"], prepped["bfc"]
    wout, bout = prepped["wout"], prepped["bout"]
    F = toep.shape[2]                 # C1 * T
    layer2 = wfc.shape[2]
    a_dim = wout.shape[1]

    tb = b_pad if b_pad <= _MAX_BATCH_TILE else _MAX_BATCH_TILE
    grid = (b_pad // tb,)

    def const(shape):                 # weights: constant block index -> resident
        return pl.BlockSpec(shape, lambda i: (0,) * len(shape))

    return pl.pallas_call(
        actor_forward_kernel,
        out_shape=jax.ShapeDtypeStruct((b_pad, a_dim), jnp.float32),
        grid=grid,
        in_specs=[
            pl.BlockSpec((3, tb, L), lambda i: (0, i, 0)),   # x, tiled over batch
            const((3, L, F)),                                # Toeplitz conv weights
            const((3, F)),                                   # conv biases
            const((3, F, layer2)),                           # fc weight (per branch)
            const((1, layer2)),                              # fc bias
            const((layer2, a_dim)),                          # actor_output weight
            const((1, a_dim)),                               # actor_output bias
        ],
        out_specs=pl.BlockSpec((tb, a_dim), lambda i: (i, 0)),
        compiler_params=pltpu.CompilerParams(
            dimension_semantics=("parallel",)),              # 2nd TC on v7x
    )(x3, toep, bconv, wfc, bfc, wout, bout)


@jax.jit
def actor_forward(x, prepped):
    """x: [B, C>=3, L] float32 (NCW, same layout as the PyTorch module)."""
    B, _, L = x.shape
    x3 = jnp.transpose(x[:, :3, :], (1, 0, 2)).astype(jnp.float32)   # [3, B, L]
    tb = B if B <= _MAX_BATCH_TILE else _MAX_BATCH_TILE
    b_pad = ((B + tb - 1) // tb) * tb
    if b_pad != B:
        x3 = jnp.pad(x3, ((0, 0), (0, b_pad - B), (0, 0)))
    out = _pallas_actor_call(x3, prepped)
    return out[:B]


# ------------------------- deterministic parameters --------------------------

def init_params(key, state_length, layer1_shape, layer2_shape, a_dim):
    num_fc_input = 3072
    ks = jax.random.split(key, 5)

    def xavier_conv(k, shape):            # shape = (out_ch, in_ch, K)
        fan_in = shape[1] * shape[2]
        fan_out = shape[0] * shape[2]
        bound = (6.0 / (fan_in + fan_out)) ** 0.5
        return jax.random.uniform(k, shape, jnp.float32, -bound, bound)

    return {
        "rConv1d.w": xavier_conv(ks[0], (layer1_shape, 1, 3)),
        "rConv1d.b": jnp.full((layer1_shape,), 0.1, jnp.float32),
        "dConv1d.w": xavier_conv(ks[1], (layer1_shape, 1, 3)),
        "dConv1d.b": jnp.full((layer1_shape,), 0.1, jnp.float32),
        "lConv1d.w": xavier_conv(ks[2], (layer1_shape, 1, 3)),
        "lConv1d.b": jnp.full((layer1_shape,), 0.1, jnp.float32),
        "fc.w": 0.01 * jax.random.normal(ks[3], (layer2_shape, num_fc_input), jnp.float32),
        "fc.b": jnp.zeros((layer2_shape,), jnp.float32),
        "actor_output.w": 0.01 * jax.random.normal(ks[4], (a_dim, layer2_shape), jnp.float32),
        "actor_output.b": jnp.zeros((a_dim,), jnp.float32),
    }


# ----------------------- pure-JAX reference (PyTorch semantics) --------------

def reference_forward(x, params):
    B = x.shape[0]

    def branch(xc, w, b):                 # xc: [B, L], w: [C1, 1, 3]
        T = xc.shape[1] - 2
        out = jnp.stack([xc[:, t:t + 3] @ w[:, 0, :].T + b for t in range(T)],
                        axis=-1)          # [B, C1, T]  (== torch Conv1d output)
        return jax.nn.relu(out)

    r = branch(x[:, 0, :], params["rConv1d.w"], params["rConv1d.b"])
    d = branch(x[:, 1, :], params["dConv1d.w"], params["dConv1d.b"])
    l = branch(x[:, 2, :], params["lConv1d.w"], params["lConv1d.b"])
    merge = jnp.concatenate(
        [r.reshape(B, -1), d.reshape(B, -1), l.reshape(B, -1)], axis=1)
    h = jax.nn.relu(merge @ params["fc.w"].T + params["fc.b"])
    logits = h @ params["actor_output.w"].T + params["actor_output.b"]
    return jax.nn.softmax(logits, axis=-1)


# ---------------------------------- main -------------------------------------

if __name__ == "__main__":
    config = dict(state_dim=3, state_length=10, layer1_shape=128,
                  layer2_shape=128, action_dim=5)
    # 128 * (10 - 2) * 3 == 3072 == numFcInput (hard-coded in the module)
    B = 2

    key = jax.random.PRNGKey(0)
    kx, kp = jax.random.split(key)
    x = jax.random.normal(kx, (B, config["state_dim"], config["state_length"]),
                          jnp.float32)
    params = init_params(kp, config["state_length"], config["layer1_shape"],
                         config["layer2_shape"], config["action_dim"])
    prepped = prepare_params(params, config["state_length"])   # one-time, hoisted

    # Module-native small batch (B=2, grid=(1,))
    out = jax.block_until_ready(actor_forward(x, prepped))
    assert out.shape == (B, config["action_dim"])
    ref = jax.block_until_ready(reference_forward(x, params))
    np.testing.assert_allclose(np.asarray(out), np.asarray(ref),
                               rtol=5e-2, atol=2e-3)

    # Batched path (grid over batch tiles, weights stay resident, padding exercised)
    Bb = 300
    xb = jax.random.normal(jax.random.PRNGKey(1),
                           (Bb, config["state_dim"], config["state_length"]),
                           jnp.float32)
    out_b = jax.block_until_ready(actor_forward(xb, prepped))
    assert out_b.shape == (Bb, config["action_dim"])
    ref_b = jax.block_until_ready(reference_forward(xb, params))
    np.testing.assert_allclose(np.asarray(out_b), np.asarray(ref_b),
                               rtol=5e-2, atol=2e-3)

    print("KERNEL_OK")
</pallas_src>

<mosaic_0001>
module attributes {stable_mosaic.version = 11 : i64} {
  func.func @actor_forward_kernel(%arg0: i32, %arg1: memref<3x2x10xf32, #tpu.memory_space<vmem>>, %arg2: memref<3x10x1024xbf16, #tpu.memory_space<vmem>>, %arg3: memref<3x1024xf32, #tpu.memory_space<vmem>>, %arg4: memref<3x1024x128xbf16, #tpu.memory_space<vmem>>, %arg5: memref<1x128xf32, #tpu.memory_space<vmem>>, %arg6: memref<128x5xbf16, #tpu.memory_space<vmem>>, %arg7: memref<1x5xf32, #tpu.memory_space<vmem>>, %arg8: memref<2x5xf32, #tpu.memory_space<vmem>>) attributes {dimension_semantics = [#tpu.dimension_semantics<parallel>], iteration_bounds = array<i64: 1>, scalar_prefetch = 0 : i64, scratch_operands = 0 : i64, tpu.core_type = #tpu.core_type<tc>, window_params = [{transform_indices = @transform_0, window_bounds = array<i64: 3, 2, 10>}, {pipeline_mode = #tpu.pipeline_mode<synchronous>, transform_indices = @transform_1, window_bounds = array<i64: 3, 10, 1024>}, {pipeline_mode = #tpu.pipeline_mode<synchronous>, transform_indices = @transform_2, window_bounds = array<i64: 3, 1024>}, {pipeline_mode = #tpu.pipeline_mode<synchronous>, transform_indices = @transform_3, window_bounds = array<i64: 3, 1024, 128>}, {pipeline_mode = #tpu.pipeline_mode<synchronous>, transform_indices = @transform_4, window_bounds = array<i64: 1, 128>}, {pipeline_mode = #tpu.pipeline_mode<synchronous>, transform_indices = @transform_5, window_bounds = array<i64: 128, 5>}, {pipeline_mode = #tpu.pipeline_mode<synchronous>, transform_indices = @transform_6, window_bounds = array<i64: 1, 5>}, {transform_indices = @transform_7, window_bounds = array<i64: 2, 5>}]} {
    %cst = arith.constant 0.000000e+00 : f32
    %0 = vector.broadcast %cst : f32 to vector<2x128xf32>
    %c0 = arith.constant 0 : index
    %c0_0 = arith.constant 0 : index
    %c0_1 = arith.constant 0 : index
    %1 = vector.load %arg1[%c0, %c0_0, %c0_1] : memref<3x2x10xf32, #tpu.memory_space<vmem>>, vector<1x2x10xf32>
    %2 = vector.shape_cast %1 : vector<1x2x10xf32> to vector<2x10xf32>
    %3 = arith.truncf %2 : vector<2x10xf32> to vector<2x10xbf16>
    %c0_2 = arith.constant 0 : index
    %c0_3 = arith.constant 0 : index
    %c0_4 = arith.constant 0 : index
    %4 = vector.load %arg2[%c0_2, %c0_3, %c0_4] : memref<3x10x1024xbf16, #tpu.memory_space<vmem>>, vector<1x10x1024xbf16>
    %5 = vector.shape_cast %4 : vector<1x10x1024xbf16> to vector<10x1024xbf16>
    %cst_5 = arith.constant dense<0.000000e+00> : vector<2x1024xf32>
    %6 = tpu.matmul %3, %5, %cst_5 {dimension_numbers = #tpu.dot_dimension_numbers<[1], [0], [0], [1], [0, 0, 1, 1], [], []>} : vector<2x10xbf16>, vector<10x1024xbf16>, vector<2x1024xf32> -> vector<2x1024xf32>
    %c0_6 = arith.constant 0 : index
    %c0_7 = arith.constant 0 : index
    %7 = vector.load %arg3[%c0_6, %c0_7] : memref<3x1024xf32, #tpu.memory_space<vmem>>, vector<1x1024xf32>
    %8 = vector.broadcast %7 : vector<1x1024xf32> to vector<2x1024xf32>
    %9 = arith.addf %6, %8 : vector<2x1024xf32>
    %cst_8 = arith.constant 0.000000e+00 : f32
    %10 = vector.broadcast %cst_8 : f32 to vector<2x1024xf32>
    %11 = arith.maximumf %9, %10 : vector<2x1024xf32>
    %12 = arith.truncf %11 : vector<2x1024xf32> to vector<2x1024xbf16>
    %c0_9 = arith.constant 0 : index
    %c0_10 = arith.constant 0 : index
    %c0_11 = arith.constant 0 : index
    %13 = vector.load %arg4[%c0_9, %c0_10, %c0_11] : memref<3x1024x128xbf16, #tpu.memory_space<vmem>>, vector<1x1024x128xbf16>
    %14 = vector.shape_cast %13 : vector<1x1024x128xbf16> to vector<1024x128xbf16>
    %cst_12 = arith.constant dense<0.000000e+00> : vector<2x128xf32>
    %15 = tpu.matmul %12, %14, %cst_12 {dimension_numbers = #tpu.dot_dimension_numbers<[1], [0], [0], [1], [0, 0, 1, 1], [], []>} : vector<2x1024xbf16>, vector<1024x128xbf16>, vector<2x128xf32> -> vector<2x128xf32>
    %16 = arith.addf %0, %15 : vector<2x128xf32>
    %c1 = arith.constant 1 : index
    %c0_13 = arith.constant 0 : index
    %c0_14 = arith.constant 0 : index
    %17 = vector.load %arg1[%c1, %c0_13, %c0_14] : memref<3x2x10xf32, #tpu.memory_space<vmem>>, vector<1x2x10xf32>
    %18 = vector.shape_cast %17 : vector<1x2x10xf32> to vector<2x10xf32>
    %19 = arith.truncf %18 : vector<2x10xf32> to vector<2x10xbf16>
    %c1_15 = arith.constant 1 : index
    %c0_16 = arith.constant 0 : index
    %c0_17 = arith.constant 0 : index
    %20 = vector.load %arg2[%c1_15, %c0_16, %c0_17] : memref<3x10x1024xbf16, #tpu.memory_space<vmem>>, vector<1x10x1024xbf16>
    %21 = vector.shape_cast %20 : vector<1x10x1024xbf16> to vector<10x1024xbf16>
    %cst_18 = arith.constant dense<0.000000e+00> : vector<2x1024xf32>
    %22 = tpu.matmul %19, %21, %cst_18 {dimension_numbers = #tpu.dot_dimension_numbers<[1], [0], [0], [1], [0, 0, 1, 1], [], []>} : vector<2x10xbf16>, vector<10x1024xbf16>, vector<2x1024xf32> -> vector<2x1024xf32>
    %c1_19 = arith.constant 1 : index
    %c0_20 = arith.constant 0 : index
    %23 = vector.load %arg3[%c1_19, %c0_20] : memref<3x1024xf32, #tpu.memory_space<vmem>>, vector<1x1024xf32>
    %24 = vector.broadcast %23 : vector<1x1024xf32> to vector<2x1024xf32>
    %25 = arith.addf %22, %24 : vector<2x1024xf32>
    %cst_21 = arith.constant 0.000000e+00 : f32
    %26 = vector.broadcast %cst_21 : f32 to vector<2x1024xf32>
    %27 = arith.maximumf %25, %26 : vector<2x1024xf32>
    %28 = arith.truncf %27 : vector<2x1024xf32> to vector<2x1024xbf16>
    %c1_22 = arith.constant 1 : index
    %c0_23 = arith.constant 0 : index
    %c0_24 = arith.constant 0 : index
    %29 = vector.load %arg4[%c1_22, %c0_23, %c0_24] : memref<3x1024x128xbf16, #tpu.memory_space<vmem>>, vector<1x1024x128xbf16>
    %30 = vector.shape_cast %29 : vector<1x1024x128xbf16> to vector<1024x128xbf16>
    %cst_25 = arith.constant dense<0.000000e+00> : vector<2x128xf32>
    %31 = tpu.matmul %28, %30, %cst_25 {dimension_numbers = #tpu.dot_dimension_numbers<[1], [0], [0], [1], [0, 0, 1, 1], [], []>} : vector<2x1024xbf16>, vector<1024x128xbf16>, vector<2x128xf32> -> vector<2x128xf32>
    %32 = arith.addf %16, %31 : vector<2x128xf32>
    %c2 = arith.constant 2 : index
    %c0_26 = arith.constant 0 : index
    %c0_27 = arith.constant 0 : index
    %33 = vector.load %arg1[%c2, %c0_26, %c0_27] : memref<3x2x10xf32, #tpu.memory_space<vmem>>, vector<1x2x10xf32>
    %34 = vector.shape_cast %33 : vector<1x2x10xf32> to vector<2x10xf32>
    %35 = arith.truncf %34 : vector<2x10xf32> to vector<2x10xbf16>
    %c2_28 = arith.constant 2 : index
    %c0_29 = arith.constant 0 : index
    %c0_30 = arith.constant 0 : index
    %36 = vector.load %arg2[%c2_28, %c0_29, %c0_30] : memref<3x10x1024xbf16, #tpu.memory_space<vmem>>, vector<1x10x1024xbf16>
    %37 = vector.shape_cast %36 : vector<1x10x1024xbf16> to vector<10x1024xbf16>
    %cst_31 = arith.constant dense<0.000000e+00> : vector<2x1024xf32>
    %38 = tpu.matmul %35, %37, %cst_31 {dimension_numbers = #tpu.dot_dimension_numbers<[1], [0], [0], [1], [0, 0, 1, 1], [], []>} : vector<2x10xbf16>, vector<10x1024xbf16>, vector<2x1024xf32> -> vector<2x1024xf32>
    %c2_32 = arith.constant 2 : index
    %c0_33 = arith.constant 0 : index
    %39 = vector.load %arg3[%c2_32, %c0_33] : memref<3x1024xf32, #tpu.memory_space<vmem>>, vector<1x1024xf32>
    %40 = vector.broadcast %39 : vector<1x1024xf32> to vector<2x1024xf32>
    %41 = arith.addf %38, %40 : vector<2x1024xf32>
    %cst_34 = arith.constant 0.000000e+00 : f32
    %42 = vector.broadcast %cst_34 : f32 to vector<2x1024xf32>
    %43 = arith.maximumf %41, %42 : vector<2x1024xf32>
    %44 = arith.truncf %43 : vector<2x1024xf32> to vector<2x1024xbf16>
    %c2_35 = arith.constant 2 : index
    %c0_36 = arith.constant 0 : index
    %c0_37 = arith.constant 0 : index
    %45 = vector.load %arg4[%c2_35, %c0_36, %c0_37] : memref<3x1024x128xbf16, #tpu.memory_space<vmem>>, vector<1x1024x128xbf16>
    %46 = vector.shape_cast %45 : vector<1x1024x128xbf16> to vector<1024x128xbf16>
    %cst_38 = arith.constant dense<0.000000e+00> : vector<2x128xf32>
    %47 = tpu.matmul %44, %46, %cst_38 {dimension_numbers = #tpu.dot_dimension_numbers<[1], [0], [0], [1], [0, 0, 1, 1], [], []>} : vector<2x1024xbf16>, vector<1024x128xbf16>, vector<2x128xf32> -> vector<2x128xf32>
    %48 = arith.addf %32, %47 : vector<2x128xf32>
    %c0_39 = arith.constant 0 : index
    %c0_40 = arith.constant 0 : index
    %49 = vector.load %arg5[%c0_39, %c0_40] : memref<1x128xf32, #tpu.memory_space<vmem>>, vector<1x128xf32>
    %50 = vector.broadcast %49 : vector<1x128xf32> to vector<2x128xf32>
    %51 = arith.addf %48, %50 : vector<2x128xf32>
    %cst_41 = arith.constant 0.000000e+00 : f32
    %52 = vector.broadcast %cst_41 : f32 to vector<2x128xf32>
    %53 = arith.maximumf %51, %52 : vector<2x128xf32>
    %54 = arith.truncf %53 : vector<2x128xf32> to vector<2x128xbf16>
    %c0_42 = arith.constant 0 : index
    %c0_43 = arith.constant 0 : index
    %55 = vector.load %arg6[%c0_42, %c0_43] : memref<128x5xbf16, #tpu.memory_space<vmem>>, vector<128x5xbf16>
    %cst_44 = arith.constant dense<0.000000e+00> : vector<2x5xf32>
    %56 = tpu.matmul %54, %55, %cst_44 {dimension_numbers = #tpu.dot_dimension_numbers<[1], [0], [0], [1], [0, 0, 1, 1], [], []>} : vector<2x128xbf16>, vector<128x5xbf16>, vector<2x5xf32> -> vector<2x5xf32>
    %c0_45 = arith.constant 0 : index
    %c0_46 = arith.constant 0 : index
    %57 = vector.load %arg7[%c0_45, %c0_46] : memref<1x5xf32, #tpu.memory_space<vmem>>, vector<1x5xf32>
    %58 = vector.broadcast %57 : vector<1x5xf32> to vector<2x5xf32>
    %59 = arith.addf %56, %58 : vector<2x5xf32>
    %cst_47 = arith.constant dense<0xFF800000> : vector<2xf32>
    %60 = vector.multi_reduction <maximumf>, %59, %cst_47 [1] : vector<2x5xf32> to vector<2xf32>
    %61 = vector.shape_cast %60 : vector<2xf32> to vector<2x1xf32>
    %62 = vector.broadcast %61 : vector<2x1xf32> to vector<2x5xf32>
    %63 = arith.subf %59, %62 : vector<2x5xf32>
    %64 = math.exp %63 : vector<2x5xf32>
    %cst_48 = arith.constant dense<0.000000e+00> : vector<2xf32>
    %65 = vector.multi_reduction <add>, %64, %cst_48 [1] : vector<2x5xf32> to vector<2xf32>
    %66 = vector.shape_cast %65 : vector<2xf32> to vector<2x1xf32>
    %67 = tpu.reciprocal %66 {approx = true} : vector<2x1xf32> -> vector<2x1xf32>
    %68 = vector.broadcast %67 : vector<2x1xf32> to vector<2x5xf32>
    %69 = arith.mulf %64, %68 : vector<2x5xf32>
    %c0_49 = arith.constant 0 : index
    %c0_50 = arith.constant 0 : index
    %70 = vector.load %arg8[%c0_49, %c0_50] : memref<2x5xf32, #tpu.memory_space<vmem>>, vector<2x5xf32>
    tpu.vector_store %arg8[%c0_49, %c0_50], %69 {strides = array<i32>} : memref<2x5xf32, #tpu.memory_space<vmem>>, vector<2x5xf32>,
    return
  }
  func.func @transform_0(%arg0: i32) -> (i32, i32, i32) {
    %c0_i32 = arith.constant 0 : i32
    %c0_i32_0 = arith.constant 0 : i32
    %c0_i32_1 = arith.constant 0 : i32
    return %c0_i32, %arg0, %c0_i32_0 : i32, i32, i32
  }
  func.func @transform_1(%arg0: i32) -> (i32, i32, i32) {
    %c0_i32 = arith.constant 0 : i32
    %c0_i32_0 = arith.constant 0 : i32
    %c0_i32_1 = arith.constant 0 : i32
    %c0_i32_2 = arith.constant 0 : i32
    return %c0_i32, %c0_i32_0, %c0_i32_1 : i32, i32, i32
  }
  func.func @transform_2(%arg0: i32) -> (i32, i32) {
    %c0_i32 = arith.constant 0 : i32
    %c0_i32_0 = arith.constant 0 : i32
    %c0_i32_1 = arith.constant 0 : i32
    return %c0_i32, %c0_i32_0 : i32, i32
  }
  func.func @transform_3(%arg0: i32) -> (i32, i32, i32) {
    %c0_i32 = arith.constant 0 : i32
    %c0_i32_0 = arith.constant 0 : i32
    %c0_i32_1 = arith.constant 0 : i32
    %c0_i32_2 = arith.constant 0 : i32
    return %c0_i32, %c0_i32_0, %c0_i32_1 : i32, i32, i32
  }
  func.func @transform_4(%arg0: i32) -> (i32, i32) {
    %c0_i32 = arith.constant 0 : i32
    %c0_i32_0 = arith.constant 0 : i32
    %c0_i32_1 = arith.constant 0 : i32
    return %c0_i32, %c0_i32_0 : i32, i32
  }
  func.func @transform_5(%arg0: i32) -> (i32, i32) {
    %c0_i32 = arith.constant 0 : i32
    %c0_i32_0 = arith.constant 0 : i32
    %c0_i32_1 = arith.constant 0 : i32
    return %c0_i32, %c0_i32_0 : i32, i32
  }
  func.func @transform_6(%arg0: i32) -> (i32, i32) {
    %c0_i32 = arith.constant 0 : i32
    %c0_i32_0 = arith.constant 0 : i32
    %c0_i32_1 = arith.constant 0 : i32
    return %c0_i32, %c0_i32_0 : i32, i32
  }
  func.func @transform_7(%arg0: i32) -> (i32, i32) {
    %c0_i32 = arith.constant 0 : i32
    %c0_i32_0 = arith.constant 0 : i32
    return %arg0, %c0_i32 : i32, i32
  }
}

</mosaic_0001>

<llo_original>
// kernel: actor_forward.1
$region0: #{actor_forward.1}
  #allocation0 [shape = 'u32[]', space=smem, size = 0x4, offset = 0x4, fixed_abs, tag = 'smem constant byte address 0x4 - core index']
  #allocation1 [shape = 'u32[72,128]{1,0:T(1,128)}', space=vmem, size = 0x9000, scoped, tag = 'internal scratch']
  %s0 = inlined_call_operand.vmem [shape: f32[3,2,10], index: 0, kind: input, shape index: {}]
  %s1 = inlined_call_operand.vmem [shape: bf16[3,10,1024], index: 1, kind: input, shape index: {}]
  %s2 = inlined_call_operand.vmem [shape: f32[3,1024], index: 2, kind: input, shape index: {}]
  %s3 = inlined_call_operand.hbm [shape: bf16[3,1024,128], index: 3, kind: input, shape index: {}]
  %s4 = inlined_call_operand.vmem [shape: f32[1,128], index: 4, kind: input, shape index: {}]
  %s5 = inlined_call_operand.vmem [shape: bf16[128,5], index: 5, kind: input, shape index: {}]
  %s6 = inlined_call_operand.vmem [shape: f32[1,5], index: 6, kind: input, shape index: {}]
  %s7 = inlined_call_operand.hbm [shape: f32[2,5], index: 7, kind: output, shape index: {}]
  %s8 = sld [smem:[#allocation0]]
  $region42: #{actor_forward.1} parent=0
    _
  %s10 = ssub.s32 1, %s8
  %s11 = scalar_select 0, %s10, %s8
  $region1: #{actor_forward.1} parent=0
    #allocation2 [shape = 'u8[786432]{0}', space=vmem, size = 0xc0000, scoped, tag = 'input window, operand 3, single buffered']
    #allocation3 [shape = 's32[1]{0}', space=sflag, size = 0x4, scoped, tag = 'scoped memory for actor_forward.1']
    #allocation4 [shape = 's32[1]{0}', space=sflag, size = 0x4, scoped, tag = 'scoped memory for actor_forward.1']
    #allocation5 [shape = 'u8[1024]{0}', space=vmem, size = 0x400, scoped, tag = 'output window, operand 0, single buffered']
    %12 = vsyncpa [#allocation3], 0
    %13 = vsyncpa [#allocation4], 0
    // Predicated region
    $region2: #{actor_forward.1} parent=1 // pred_check
      _
    $region3: #{actor_forward.1} parent=1 // pred_check_branch
      %15 = sbr.rel (0) target = $region5
    $region4: #{actor_forward.1} parent=1 // pred_region
      _
    $region5: #{actor_forward.1} parent=1 // pred_fallthru
      _
    // Predicated region
    $region6: #{actor_forward.1} parent=1 // pred_check
      _
    $region7: #{actor_forward.1} parent=1 // pred_check_branch
      %17 = sbr.rel (0) target = $region9
    $region8: #{actor_forward.1} parent=1 // pred_region
      _
    $region9: #{actor_forward.1} parent=1 // pred_fallthru
      _
    // Predicated region
    $region10: #{actor_forward.1} parent=1 // pred_check
      _
    $region11: #{actor_forward.1} parent=1 // pred_check_branch
      %19 = sbr.rel (0) target = $region13
    $region12: #{actor_forward.1} parent=1 // pred_region
      _
    $region13: #{actor_forward.1} parent=1 // pred_fallthru
      _
    // Predicated region
    $region14: #{actor_forward.1} parent=1 // pred_check
      _
    $region15: #{actor_forward.1} parent=1 // pred_check_branch
      %21 = sbr.rel (0) target = $region17
    $region16: #{actor_forward.1} parent=1 // pred_region
      %23 = vsyncadd [#allocation3], 0
      %s24 = sshll.u32 %s3, 4
      %s25 = int_to_ptr.hbm [resolvable:$true] %s24
      %s26 = sshll.u32 [#allocation2], 4
      %s27 = int_to_ptr.vmem [resolvable:$true] %s26
      %32 = dma.hbm_to_vmem [thread:$0]  %s25, 24576, %s27, [#allocation3], 64, 64, 4
    $region17: #{actor_forward.1} parent=1 // pred_fallthru
      _
    // Predicated region
    $region18: #{actor_forward.1} parent=1 // pred_check
      _
    $region19: #{actor_forward.1} parent=1 // pred_check_branch
      %34 = sbr.rel (0) target = $region21
    $region20: #{actor_forward.1} parent=1 // pred_region
      _
    $region21: #{actor_forward.1} parent=1 // pred_fallthru
      _
    // Predicated region
    $region22: #{actor_forward.1} parent=1 // pred_check
      _
    $region23: #{actor_forward.1} parent=1 // pred_check_branch
      %36 = sbr.rel (0) target = $region25
    $region24: #{actor_forward.1} parent=1 // pred_region
      _
    $region25: #{actor_forward.1} parent=1 // pred_fallthru
      _
    // Predicated region
    $region26: #{actor_forward.1} parent=1 // pred_check
      _
    $region27: #{actor_forward.1} parent=1 // pred_check_branch
      %38 = sbr.rel (0) target = $region29
    $region28: #{actor_forward.1} parent=1 // pred_region
      _
    $region29: #{actor_forward.1} parent=1 // pred_fallthru
      _
    // Predicated region
    $region30: #{actor_forward.1} parent=1 // pred_check
      _
    $region31: #{actor_forward.1} parent=1 // pred_check_branch
      %40 = sbr.rel (0) target = $region33
    $region32: #{actor_forward.1} parent=1 // pred_region
      %42 = dma.done [#allocation3], 24576
    $region33: #{actor_forward.1} parent=1 // pred_fallthru
      _
    %v44 = vld [vmem:[%s0] sm:$0x3]
    %v45 = vpack.c.bf16 %v44, %v44
    %v46 = vld [vmem:[%s1] sm:$0xff]
    %v47 = vld [vmem:[%s1 + $0x8] sm:$0xff]
    %v48 = vld [vmem:[%s1 + $0x10] sm:$0xff]
    %v49 = vld [vmem:[%s1 + $0x18] sm:$0xff]
    %v50 = vld [vmem:[%s1 + $0x20] sm:$0x11]
    %v51 = vld [vmem:[%s1 + $0x28] sm:$0x11]
    %v52 = vld [vmem:[%s1 + $0x30] sm:$0x11]
    %v53 = vld [vmem:[%s1 + $0x38] sm:$0x11]
    %v54 = vld [vmem:[%s2] ss:$4 sm:$0xff]
    %v56 = vperm.slane %v54, 0
    %v57 = vperm.slane %v54, 1
    %v58 = vperm.slane %v54, 2
    %v59 = vperm.slane %v54, 3
    %v60 = vperm.slane %v54, 4
    %v61 = vperm.slane %v54, 5
    %v62 = vperm.slane %v54, 6
    %v63 = vperm.slane %v54, 7
    %v80 = vunpack.c.l.b16 %v46
    %v81 = vunpack.c.h.b16 %v46
    %v82 = vunpack.c.l.b16 %v47
    %v83 = vunpack.c.h.b16 %v47
    %v84 = vunpack.c.l.b16 %v48
    %v85 = vunpack.c.h.b16 %v48
    %v86 = vunpack.c.l.b16 %v49
    %v87 = vunpack.c.h.b16 %v49
    %v88 = vunpack.c.l.b16 %v50
    %v89 = vunpack.c.h.b16 %v50
    %v90 = vunpack.c.l.b16 %v51
    %v91 = vunpack.c.h.b16 %v51
    %v92 = vunpack.c.l.b16 %v52
    %v93 = vunpack.c.h.b16 %v52
    %v94 = vunpack.c.l.b16 %v53
    %v95 = vunpack.c.h.b16 %v53
    %v96 = vpack.c.b16 %v88, %v80
    %v97 = vpack.c.b16 %v89, %v81
    %v98 = vpack.c.b16 %v90, %v82
    %v99 = vpack.c.b16 %v91, %v83
    %v100 = vpack.c.b16 %v92, %v84
    %v101 = vpack.c.b16 %v93, %v85
    %v102 = vpack.c.b16 %v94, %v86
    %v103 = vpack.c.b16 %v95, %v87
    %vm104 = vcmask 80896
    %v106 = vsel %vm104, %v45, 0
    %vm108 = vcmask 1044480
    %v110 = vsel %vm108, %v96, 0
    %v113 = vsel %vm108, %v97, 0
    %v116 = vsel %vm108, %v98, 0
    %v119 = vsel %vm108, %v99, 0
    %v122 = vsel %vm108, %v100, 0
    %v125 = vsel %vm108, %v101, 0
    %v128 = vsel %vm108, %v102, 0
    %v131 = vsel %vm108, %v103, 0
    %133 = vmatpush.bf16.msra.mxu0 0
    %134 = vmatpush.bf16.msra.mxu0 0
    %135 = vmatpush.bf16.msra.mxu0 0
    %136 = vmatpush.bf16.msra.mxu0 0
    %137 = vmatpush.bf16.msra.mxu0 0
    %138 = vmatpush.bf16.msra.mxu0 0
    %139 = vmatpush.bf16.msra.mxu0 0
    %140 = vmatpush.bf16.msra.mxu0 %v110
    %141 = vmatmul.bf16.gmra.mxu0 %v106
    %v142 = vpop.f32.mrf.mxu0
    %v143 = vadd.f32 %v56, %v142
    %v144 = vpop.f32.mrf.mxu0
    %145 = vdwg.mxu0
    %146 = vmatpush.bf16.msra.mxu0 0
    %147 = vmatpush.bf16.msra.mxu0 0
    %148 = vmatpush.bf16.msra.mxu0 0
    %149 = vmatpush.bf16.msra.mxu0 0
    %150 = vmatpush.bf16.msra.mxu0 0
    %151 = vmatpush.bf16.msra.mxu0 0
    %152 = vmatpush.bf16.msra.mxu0 0
    %153 = vmatpush.bf16.msra.mxu0 %v113
    %154 = vmatmul.bf16.gmra.mxu0 %v106
    %v155 = vpop.f32.mrf.mxu0
    %v156 = vadd.f32 %v57, %v155
    %v157 = vpop.f32.mrf.mxu0
    %158 = vdwg.mxu0
    %159 = vmatpush.bf16.msra.mxu0 0
    %160 = vmatpush.bf16.msra.mxu0 0
    %161 = vmatpush.bf16.msra.mxu0 0
    %162 = vmatpush.bf16.msra.mxu0 0
    %163 = vmatpush.bf16.msra.mxu0 0
    %164 = vmatpush.bf16.msra.mxu0 0
    %165 = vmatpush.bf16.msra.mxu0 0
    %166 = vmatpush.bf16.msra.mxu0 %v116
    %167 = vmatmul.bf16.gmra.mxu0 %v106
    %v168 = vpop.f32.mrf.mxu0
    %v169 = vadd.f32 %v58, %v168
    %v170 = vpop.f32.mrf.mxu0
    %171 = vdwg.mxu0
    %172 = vmatpush.bf16.msra.mxu0 0
    %173 = vmatpush.bf16.msra.mxu0 0
    %174 = vmatpush.bf16.msra.mxu0 0
    %175 = vmatpush.bf16.msra.mxu0 0
    %176 = vmatpush.bf16.msra.mxu0 0
    %177 = vmatpush.bf16.msra.mxu0 0
    %178 = vmatpush.bf16.msra.mxu0 0
    %179 = vmatpush.bf16.msra.mxu0 %v119
    %180 = vmatmul.bf16.gmra.mxu0 %v106
    %v181 = vpop.f32.mrf.mxu0
    %v182 = vadd.f32 %v59, %v181
    %v183 = vpop.f32.mrf.mxu0
    %184 = vdwg.mxu0
    %185 = vmatpush.bf16.msra.mxu0 0
    %186 = vmatpush.bf16.msra.mxu0 0
    %187 = vmatpush.bf16.msra.mxu0 0
    %188 = vmatpush.bf16.msra.mxu0 0
    %189 = vmatpush.bf16.msra.mxu0 0
    %190 = vmatpush.bf16.msra.mxu0 0
    %191 = vmatpush.bf16.msra.mxu0 0
    %192 = vmatpush.bf16.msra.mxu0 %v122
    %193 = vmatmul.bf16.gmra.mxu0 %v106
    %v194 = vpop.f32.mrf.mxu0
    %v195 = vadd.f32 %v60, %v194
    %v196 = vpop.f32.mrf.mxu0
    %197 = vdwg.mxu0
    %198 = vmatpush.bf16.msra.mxu0 0
    %199 = vmatpush.bf16.msra.mxu0 0
    %200 = vmatpush.bf16.msra.mxu0 0
    %201 = vmatpush.bf16.msra.mxu0 0
    %202 = vmatpush.bf16.msra.mxu0 0
    %203 = vmatpush.bf16.msra.mxu0 0
    %204 = vmatpush.bf16.msra.mxu0 0
    %205 = vmatpush.bf16.msra.mxu0 %v125
    %206 = vmatmul.bf16.gmra.mxu0 %v106
    %v207 = vpop.f32.mrf.mxu0
    %v208 = vadd.f32 %v61, %v207
    %v209 = vpop.f32.mrf.mxu0
    %210 = vdwg.mxu0
    %211 = vmatpush.bf16.msra.mxu0 0
    %212 = vmatpush.bf16.msra.mxu0 0
    %213 = vmatpush.bf16.msra.mxu0 0
    %214 = vmatpush.bf16.msra.mxu0 0
    %215 = vmatpush.bf16.msra.mxu0 0
    %216 = vmatpush.bf16.msra.mxu0 0
    %217 = vmatpush.bf16.msra.mxu0 0
    %218 = vmatpush.bf16.msra.mxu0 %v128
    %219 = vmatmul.bf16.gmra.mxu0 %v106
    %v220 = vpop.f32.mrf.mxu0
    %v221 = vadd.f32 %v62, %v220
    %v222 = vpop.f32.mrf.mxu0
    %223 = vdwg.mxu0
    %224 = vmatpush.bf16.msra.mxu0 0
    %225 = vmatpush.bf16.msra.mxu0 0
    %226 = vmatpush.bf16.msra.mxu0 0
    %227 = vmatpush.bf16.msra.mxu0 0
    %228 = vmatpush.bf16.msra.mxu0 0
    %229 = vmatpush.bf16.msra.mxu0 0
    %230 = vmatpush.bf16.msra.mxu0 0
    %231 = vmatpush.bf16.msra.mxu0 %v131
    %232 = vmatmul.bf16.gmra.mxu0 %v106
    %v233 = vpop.f32.mrf.mxu0
    %v234 = vadd.f32 %v63, %v233
    %v235 = vpop.f32.mrf.mxu0
    %236 = vdwg.mxu0
    %v237 = vmax.f32 %v143, 0.0
    %v238 = vmax.f32 %v156, 0.0
    %v239 = vmax.f32 %v169, 0.0
    %v240 = vmax.f32 %v182, 0.0
    %v241 = vmax.f32 %v195, 0.0
    %v242 = vmax.f32 %v208, 0.0
    %v243 = vmax.f32 %v221, 0.0
    %v244 = vmax.f32 %v234, 0.0
    %v245 = vpack.c.bf16 %v237, %v237
    %v246 = vpack.c.bf16 %v238, %v238
    %v247 = vpack.c.bf16 %v239, %v239
    %v248 = vpack.c.bf16 %v240, %v240
    %v249 = vpack.c.bf16 %v241, %v241
    %v250 = vpack.c.bf16 %v242, %v242
    %v251 = vpack.c.bf16 %v243, %v243
    %v252 = vpack.c.bf16 %v244, %v244
    %v253 = vld [vmem:[#allocation2] sm:$0xf]
    %v254 = vld [vmem:[#allocation2 + $0x4] sm:$0xf]
    %v255 = vld [vmem:[#allocation2 + $0x8] sm:$0xf]
    %v256 = vld [vmem:[#allocation2 + $0xc] sm:$0xf]
    %v257 = vld [vmem:[#allocation2 + $0x10] sm:$0xf]
    %v258 = vld [vmem:[#allocation2 + $0x14] sm:$0xf]
    %v259 = vld [vmem:[#allocation2 + $0x18] sm:$0xf]
    %v260 = vld [vmem:[#allocation2 + $0x1c] sm:$0xf]
    %v261 = vld [vmem:[#allocation2 + $0x20] sm:$0xf]
    %v262 = vld [vmem:[#allocation2 + $0x24] sm:$0xf]
    %v263 = vld [vmem:[#allocation2 + $0x28] sm:$0xf]
    %v264 = vld [vmem:[#allocation2 + $0x2c] sm:$0xf]
    %v265 = vld [vmem:[#allocation2 + $0x30] sm:$0xf]
    %v266 = vld [vmem:[#allocation2 + $0x34] sm:$0xf]
    %v267 = vld [vmem:[#allocation2 + $0x38] sm:$0xf]
    %v268 = vld [vmem:[#allocation2 + $0x3c] sm:$0xf]
    %v269 = vld [vmem:[#allocation2 + $0x40] sm:$0xf]
    %v270 = vld [vmem:[#allocation2 + $0x44] sm:$0xf]
    %v271 = vld [vmem:[#allocation2 + $0x48] sm:$0xf]
    %v272 = vld [vmem:[#allocation2 + $0x4c] sm:$0xf]
    %v273 = vld [vmem:[#allocation2 + $0x50] sm:$0xf]
    %v274 = vld [vmem:[#allocation2 + $0x54] sm:$0xf]
    %v275 = vld [vmem:[#allocation2 + $0x58] sm:$0xf]
    %v276 = vld [vmem:[#allocation2 + $0x5c] sm:$0xf]
    %v277 = vld [vmem:[#allocation2 + $0x60] sm:$0xf]
    %v278 = vld [vmem:[#allocation2 + $0x64] sm:$0xf]
    %v279 = vld [vmem:[#allocation2 + $0x68] sm:$0xf]
    %v280 = vld [vmem:[#allocation2 + $0x6c] sm:$0xf]
    %v281 = vld [vmem:[#allocation2 + $0x70] sm:$0xf]
    %v282 = vld [vmem:[#allocation2 + $0x74] sm:$0xf]
    %v283 = vld [vmem:[#allocation2 + $0x78] sm:$0xf]
    %v284 = vld [vmem:[#allocation2 + $0x7c] sm:$0xf]
    %v285 = vld [vmem:[#allocation2 + $0x80] sm:$0xf]
    %v286 = vld [vmem:[#allocation2 + $0x84] sm:$0xf]
    %v287 = vld [vmem:[#allocation2 + $0x88] sm:$0xf]
    %v288 = vld [vmem:[#allocation2 + $0x8c] sm:$0xf]
    %v289 = vld [vmem:[#allocation2 + $0x90] sm:$0xf]
    %v290 = vld [vmem:[#allocation2 + $0x94] sm:$0xf]
    %v291 = vld [vmem:[#allocation2 + $0x98] sm:$0xf]
    %v292 = vld [vmem:[#allocation2 + $0x9c] sm:$0xf]
    %v293 = vld [vmem:[#allocation2 + $0xa0] sm:$0xf]
    %v294 = vld [vmem:[#allocation2 + $0xa4] sm:$0xf]
    %v295 = vld [vmem:[#allocation2 + $0xa8] sm:$0xf]
    %v296 = vld [vmem:[#allocation2 + $0xac] sm:$0xf]
    %v297 = vld [vmem:[#allocation2 + $0xb0] sm:$0xf]
    %v298 = vld [vmem:[#allocation2 + $0xb4] sm:$0xf]
    %v299 = vld [vmem:[#allocation2 + $0xb8] sm:$0xf]
    %v300 = vld [vmem:[#allocation2 + $0xbc] sm:$0xf]
    %v301 = vld [vmem:[#allocation2 + $0xc0] sm:$0xf]
    %v302 = vld [vmem:[#allocation2 + $0xc4] sm:$0xf]
    %v303 = vld [vmem:[#allocation2 + $0xc8] sm:$0xf]
    %v304 = vld [vmem:[#allocation2 + $0xcc] sm:$0xf]
    %v305 = vld [vmem:[#allocation2 + $0xd0] sm:$0xf]
    %v306 = vld [vmem:[#allocation2 + $0xd4] sm:$0xf]
    %v307 = vld [vmem:[#allocation2 + $0xd8] sm:$0xf]
    %v308 = vld [vmem:[#allocation2 + $0xdc] sm:$0xf]
    %v309 = vld [vmem:[#allocation2 + $0xe0] sm:$0xf]
    %v310 = vld [vmem:[#allocation2 + $0xe4] sm:$0xf]
    %v311 = vld [vmem:[#allocation2 + $0xe8] sm:$0xf]
    %v312 = vld [vmem:[#allocation2 + $0xec] sm:$0xf]
    %v313 = vld [vmem:[#allocation2 + $0xf0] sm:$0xf]
    %v314 = vld [vmem:[#allocation2 + $0xf4] sm:$0xf]
    %v315 = vld [vmem:[#allocation2 + $0xf8] sm:$0xf]
    %v316 = vld [vmem:[#allocation2 + $0xfc] sm:$0xf]
    %v317 = vld [vmem:[#allocation2 + $0x100] sm:$0xf]
    %v318 = vld [vmem:[#allocation2 + $0x104] sm:$0xf]
    %v319 = vld [vmem:[#allocation2 + $0x108] sm:$0xf]
    %v320 = vld [vmem:[#allocation2 + $0x10c] sm:$0xf]
    %v321 = vld [vmem:[#allocation2 + $0x110] sm:$0xf]
    %v322 = vld [vmem:[#allocation2 + $0x114] sm:$0xf]
    %v323 = vld [vmem:[#allocation2 + $0x118] sm:$0xf]
    %v324 = vld [vmem:[#allocation2 + $0x11c] sm:$0xf]
    %v325 = vld [vmem:[#allocation2 + $0x120] sm:$0xf]
    %v326 = vld [vmem:[#allocation2 + $0x124] sm:$0xf]
    %v327 = vld [vmem:[#allocation2 + $0x128] sm:$0xf]
    %v328 = vld [vmem:[#allocation2 + $0x12c] sm:$0xf]
    %v329 = vld [vmem:[#allocation2 + $0x130] sm:$0xf]
    %v330 = vld [vmem:[#allocation2 + $0x134] sm:$0xf]
    %v331 = vld [vmem:[#allocation2 + $0x138] sm:$0xf]
    %v332 = vld [vmem:[#allocation2 + $0x13c] sm:$0xf]
    %v333 = vld [vmem:[#allocation2 + $0x140] sm:$0xf]
    %v334 = vld [vmem:[#allocation2 + $0x144] sm:$0xf]
    %v335 = vld [vmem:[#allocation2 + $0x148] sm:$0xf]
    %v336 = vld [vmem:[#allocation2 + $0x14c] sm:$0xf]
    %v337 = vld [vmem:[#allocation2 + $0x150] sm:$0xf]
    %v338 = vld [vmem:[#allocation2 + $0x154] sm:$0xf]
    %v339 = vld [vmem:[#allocation2 + $0x158] sm:$0xf]
    %v340 = vld [vmem:[#allocation2 + $0x15c] sm:$0xf]
    %v341 = vld [vmem:[#allocation2 + $0x160] sm:$0xf]
    %v342 = vld [vmem:[#allocation2 + $0x164] sm:$0xf]
    %v343 = vld [vmem:[#allocation2 + $0x168] sm:$0xf]
    %v344 = vld [vmem:[#allocation2 + $0x16c] sm:$0xf]
    %v345 = vld [vmem:[#allocation2 + $0x170] sm:$0xf]
    %v346 = vld [vmem:[#allocation2 + $0x174] sm:$0xf]
    %v347 = vld [vmem:[#allocation2 + $0x178] sm:$0xf]
    %v348 = vld [vmem:[#allocation2 + $0x17c] sm:$0xf]
    %v349 = vld [vmem:[#allocation2 + $0x180] sm:$0xf]
    %v350 = vld [vmem:[#allocation2 + $0x184] sm:$0xf]
    %v351 = vld [vmem:[#allocation2 + $0x188] sm:$0xf]
    %v352 = vld [vmem:[#allocation2 + $0x18c] sm:$0xf]
    %v353 = vld [vmem:[#allocation2 + $0x190] sm:$0xf]
    %v354 = vld [vmem:[#allocation2 + $0x194] sm:$0xf]
    %v355 = vld [vmem:[#allocation2 + $0x198] sm:$0xf]
    %v356 = vld [vmem:[#allocation2 + $0x19c] sm:$0xf]
    %v357 = vld [vmem:[#allocation2 + $0x1a0] sm:$0xf]
    %v358 = vld [vmem:[#allocation2 + $0x1a4] sm:$0xf]
    %v359 = vld [vmem:[#allocation2 + $0x1a8] sm:$0xf]
    %v360 = vld [vmem:[#allocation2 + $0x1ac] sm:$0xf]
    %v361 = vld [vmem:[#allocation2 + $0x1b0] sm:$0xf]
    %v362 = vld [vmem:[#allocation2 + $0x1b4] sm:$0xf]
    %v363 = vld [vmem:[#allocation2 + $0x1b8] sm:$0xf]
    %v364 = vld [vmem:[#allocation2 + $0x1bc] sm:$0xf]
    %v365 = vld [vmem:[#allocation2 + $0x1c0] sm:$0xf]
    %v366 = vld [vmem:[#allocation2 + $0x1c4] sm:$0xf]
    %v367 = vld [vmem:[#allocation2 + $0x1c8] sm:$0xf]
    %v368 = vld [vmem:[#allocation2 + $0x1cc] sm:$0xf]
    %v369 = vld [vmem:[#allocation2 + $0x1d0] sm:$0xf]
    %v370 = vld [vmem:[#allocation2 + $0x1d4] sm:$0xf]
    %v371 = vld [vmem:[#allocation2 + $0x1d8] sm:$0xf]
    %v372 = vld [vmem:[#allocation2 + $0x1dc] sm:$0xf]
    %v373 = vld [vmem:[#allocation2 + $0x1e0] sm:$0xf]
    %v374 = vld [vmem:[#allocation2 + $0x1e4] sm:$0xf]
    %v375 = vld [vmem:[#allocation2 + $0x1e8] sm:$0xf]
    %v376 = vld [vmem:[#allocation2 + $0x1ec] sm:$0xf]
    %v377 = vld [vmem:[#allocation2 + $0x1f0] sm:$0xf]
    %v378 = vld [vmem:[#allocation2 + $0x1f4] sm:$0xf]
    %v379 = vld [vmem:[#allocation2 + $0x1f8] sm:$0xf]
    %v380 = vld [vmem:[#allocation2 + $0x1fc] sm:$0xf]
    %s381 = scalar_lea.vmem %s0, 2
    %v382 = vld [vmem:[%s381] sm:$0x3]
    %v383 = vpack.c.bf16 %v382, %v382
    %s384 = scalar_lea.vmem %s1, 64
    %v385 = vld [vmem:[%s384] sm:$0xff]
    %v386 = vld [vmem:[%s384 + $0x8] sm:$0xff]
    %v387 = vld [vmem:[%s384 + $0x10] sm:$0xff]
    %v388 = vld [vmem:[%s384 + $0x18] sm:$0xff]
    %v389 = vld [vmem:[%s384 + $0x20] sm:$0x11]
    %v390 = vld [vmem:[%s384 + $0x28] sm:$0x11]
    %v391 = vld [vmem:[%s384 + $0x30] sm:$0x11]
    %v392 = vld [vmem:[%s384 + $0x38] sm:$0x11]
    %s393 = scalar_lea.vmem %s2, 1
    %v394 = vld [vmem:[%s393] ss:$4 sm:$0xff]
    %v396 = vperm.slane %v394, 0
    %v397 = vperm.slane %v394, 1
    %v398 = vperm.slane %v394, 2
    %v399 = vperm.slane %v394, 3
    %v400 = vperm.slane %v394, 4
    %v401 = vperm.slane %v394, 5
    %v402 = vperm.slane %v394, 6
    %v403 = vperm.slane %v394, 7
    %v420 = vunpack.c.l.b16 %v385
    %v421 = vunpack.c.h.b16 %v385
    %v422 = vunpack.c.l.b16 %v386
    %v423 = vunpack.c.h.b16 %v386
    %v424 = vunpack.c.l.b16 %v387
    %v425 = vunpack.c.h.b16 %v387
    %v426 = vunpack.c.l.b16 %v388
    %v427 = vunpack.c.h.b16 %v388
    %v428 = vunpack.c.l.b16 %v389
    %v429 = vunpack.c.h.b16 %v389
    %v430 = vunpack.c.l.b16 %v390
    %v431 = vunpack.c.h.b16 %v390
    %v432 = vunpack.c.l.b16 %v391
    %v433 = vunpack.c.h.b16 %v391
    %v434 = vunpack.c.l.b16 %v392
    %v435 = vunpack.c.h.b16 %v392
    %v436 = vpack.c.b16 %v428, %v420
    %v437 = vpack.c.b16 %v429, %v421
    %v438 = vpack.c.b16 %v430, %v422
    %v439 = vpack.c.b16 %v431, %v423
    %v440 = vpack.c.b16 %v432, %v424
    %v441 = vpack.c.b16 %v433, %v425
    %v442 = vpack.c.b16 %v434, %v426
    %v443 = vpack.c.b16 %v435, %v427
    %v445 = vsel %vm104, %v383, 0
    %v448 = vsel %vm108, %v436, 0
    %v451 = vsel %vm108, %v437, 0
    %v454 = vsel %vm108, %v438, 0
    %v457 = vsel %vm108, %v439, 0
    %v460 = vsel %vm108, %v440, 0
    %v463 = vsel %vm108, %v441, 0
    %v466 = vsel %vm108, %v442, 0
    %v469 = vsel %vm108, %v443, 0
    %471 = vmatpush.bf16.msra.mxu0 0
    %472 = vmatpush.bf16.msra.mxu0 0
    %473 = vmatpush.bf16.msra.mxu0 0
    %474 = vmatpush.bf16.msra.mxu0 0
    %475 = vmatpush.bf16.msra.mxu0 0
    %476 = vmatpush.bf16.msra.mxu0 0
    %477 = vmatpush.bf16.msra.mxu0 0
    %478 = vmatpush.bf16.msra.mxu0 %v448
    %479 = vmatmul.bf16.gmra.mxu0 %v445
    %v480 = vpop.f32.mrf.mxu0
    %v481 = vadd.f32 %v396, %v480
    %v482 = vpop.f32.mrf.mxu0
    %483 = vdwg.mxu0
    %484 = vmatpush.bf16.msra.mxu0 0
    %485 = vmatpush.bf16.msra.mxu0 0
    %486 = vmatpush.bf16.msra.mxu0 0
    %487 = vmatpush.bf16.msra.mxu0 0
    %488 = vmatpush.bf16.msra.mxu0 0
    %489 = vmatpush.bf16.msra.mxu0 0
    %490 = vmatpush.bf16.msra.mxu0 0
    %491 = vmatpush.bf16.msra.mxu0 %v451
    %492 = vmatmul.bf16.gmra.mxu0 %v445
    %v493 = vpop.f32.mrf.mxu0
    %v494 = vadd.f32 %v397, %v493
    %v495 = vpop.f32.mrf.mxu0
    %496 = vdwg.mxu0
    %497 = vmatpush.bf16.msra.mxu0 0
    %498 = vmatpush.bf16.msra.mxu0 0
    %499 = vmatpush.bf16.msra.mxu0 0
    %500 = vmatpush.bf16.msra.mxu0 0
    %501 = vmatpush.bf16.msra.mxu0 0
    %502 = vmatpush.bf16.msra.mxu0 0
    %503 = vmatpush.bf16.msra.mxu0 0
    %504 = vmatpush.bf16.msra.mxu0 %v454
    %505 = vmatmul.bf16.gmra.mxu0 %v445
    %v506 = vpop.f32.mrf.mxu0
    %v507 = vadd.f32 %v398, %v506
    %v508 = vpop.f32.mrf.mxu0
    %509 = vdwg.mxu0
    %510 = vmatpush.bf16.msra.mxu0 0
    %511 = vmatpush.bf16.msra.mxu0 0
    %512 = vmatpush.bf16.msra.mxu0 0
    %513 = vmatpush.bf16.msra.mxu0 0
    %514 = vmatpush.bf16.msra.mxu0 0
    %515 = vmatpush.bf16.msra.mxu0 0
    %516 = vmatpush.bf16.msra.mxu0 0
    %517 = vmatpush.bf16.msra.mxu0 %v457
    %518 = vmatmul.bf16.gmra.mxu0 %v445
    %v519 = vpop.f32.mrf.mxu0
    %v520 = vadd.f32 %v399, %v519
    %v521 = vpop.f32.mrf.mxu0
    %522 = vdwg.mxu0
    %523 = vmatpush.bf16.msra.mxu0 0
    %524 = vmatpush.bf16.msra.mxu0 0
    %525 = vmatpush.bf16.msra.mxu0 0
    %526 = vmatpush.bf16.msra.mxu0 0
    %527 = vmatpush.bf16.msra.mxu0 0
    %528 = vmatpush.bf16.msra.mxu0 0
    %529 = vmatpush.bf16.msra.mxu0 0
    %530 = vmatpush.bf16.msra.mxu0 %v460
    %531 = vmatmul.bf16.gmra.mxu0 %v445
    %v532 = vpop.f32.mrf.mxu0
    %v533 = vadd.f32 %v400, %v532
    %v534 = vpop.f32.mrf.mxu0
    %535 = vdwg.mxu0
    %536 = vmatpush.bf16.msra.mxu0 0
    %537 = vmatpush.bf16.msra.mxu0 0
    %538 = vmatpush.bf16.msra.mxu0 0
    %539 = vmatpush.bf16.msra.mxu0 0
    %540 = vmatpush.bf16.msra.mxu0 0
    %541 = vmatpush.bf16.msra.mxu0 0
    %542 = vmatpush.bf16.msra.mxu0 0
    %543 = vmatpush.bf16.msra.mxu0 %v463
    %544 = vmatmul.bf16.gmra.mxu0 %v445
    %v545 = vpop.f32.mrf.mxu0
    %v546 = vadd.f32 %v401, %v545
    %v547 = vpop.f32.mrf.mxu0
    %548 = vdwg.mxu0
    %549 = vmatpush.bf16.msra.mxu0 0
    %550 = vmatpush.bf16.msra.mxu0 0
    %551 = vmatpush.bf16.msra.mxu0 0
    %552 = vmatpush.bf16.msra.mxu0 0
    %553 = vmatpush.bf16.msra.mxu0 0
    %554 = vmatpush.bf16.msra.mxu0 0
    %555 = vmatpush.bf16.msra.mxu0 0
    %556 = vmatpush.bf16.msra.mxu0 %v466
    %557 = vmatmul.bf16.gmra.mxu0 %v445
    %v558 = vpop.f32.mrf.mxu0
    %v559 = vadd.f32 %v402, %v558
    %v560 = vpop.f32.mrf.mxu0
    %561 = vdwg.mxu0
    %562 = vmatpush.bf16.msra.mxu0 0
    %563 = vmatpush.bf16.msra.mxu0 0
    %564 = vmatpush.bf16.msra.mxu0 0
    %565 = vmatpush.bf16.msra.mxu0 0
    %566 = vmatpush.bf16.msra.mxu0 0
    %567 = vmatpush.bf16.msra.mxu0 0
    %568 = vmatpush.bf16.msra.mxu0 0
    %569 = vmatpush.bf16.msra.mxu0 %v469
    %570 = vmatmul.bf16.gmra.mxu0 %v445
    %v571 = vpop.f32.mrf.mxu0
    %v572 = vadd.f32 %v403, %v571
    %v573 = vpop.f32.mrf.mxu0
    %574 = vdwg.mxu0
    %v575 = vmax.f32 %v481, 0.0
    %v576 = vmax.f32 %v494, 0.0
    %v577 = vmax.f32 %v507, 0.0
    %v578 = vmax.f32 %v520, 0.0
    %v579 = vmax.f32 %v533, 0.0
    %v580 = vmax.f32 %v546, 0.0
    %v581 = vmax.f32 %v559, 0.0
    %v582 = vmax.f32 %v572, 0.0
    %v583 = vpack.c.bf16 %v575, %v575
    %v584 = vpack.c.bf16 %v576, %v576
    %v585 = vpack.c.bf16 %v577, %v577
    %v586 = vpack.c.bf16 %v578, %v578
    %v587 = vpack.c.bf16 %v579, %v579
    %v588 = vpack.c.bf16 %v580, %v580
    %v589 = vpack.c.bf16 %v581, %v581
    %v590 = vpack.c.bf16 %v582, %v582
    %s591 = scalar_lea.vmem [#allocation2], 512
    %v592 = vld [vmem:[%s591] sm:$0xf]
    %v593 = vld [vmem:[%s591 + $0x4] sm:$0xf]
    %v594 = vld [vmem:[%s591 + $0x8] sm:$0xf]
    %v595 = vld [vmem:[%s591 + $0xc] sm:$0xf]
    %v596 = vld [vmem:[%s591 + $0x10] sm:$0xf]
    %v597 = vld [vmem:[%s591 + $0x14] sm:$0xf]
    %v598 = vld [vmem:[%s591 + $0x18] sm:$0xf]
    %v599 = vld [vmem:[%s591 + $0x1c] sm:$0xf]
    %v600 = vld [vmem:[%s591 + $0x20] sm:$0xf]
    %v601 = vld [vmem:[%s591 + $0x24] sm:$0xf]
    %v602 = vld [vmem:[%s591 + $0x28] sm:$0xf]
    %v603 = vld [vmem:[%s591 + $0x2c] sm:$0xf]
    %v604 = vld [vmem:[%s591 + $0x30] sm:$0xf]
    %v605 = vld [vmem:[%s591 + $0x34] sm:$0xf]
    %v606 = vld [vmem:[%s591 + $0x38] sm:$0xf]
    %v607 = vld [vmem:[%s591 + $0x3c] sm:$0xf]
    %v608 = vld [vmem:[%s591 + $0x40] sm:$0xf]
    %v609 = vld [vmem:[%s591 + $0x44] sm:$0xf]
    %v610 = vld [vmem:[%s591 + $0x48] sm:$0xf]
    %v611 = vld [vmem:[%s591 + $0x4c] sm:$0xf]
    %v612 = vld [vmem:[%s591 + $0x50] sm:$0xf]
    %v613 = vld [vmem:[%s591 + $0x54] sm:$0xf]
    %v614 = vld [vmem:[%s591 + $0x58] sm:$0xf]
    %v615 = vld [vmem:[%s591 + $0x5c] sm:$0xf]
    %v616 = vld [vmem:[%s591 + $0x60] sm:$0xf]
    %v617 = vld [vmem:[%s591 + $0x64] sm:$0xf]
    %v618 = vld [vmem:[%s591 + $0x68] sm:$0xf]
    %v619 = vld [vmem:[%s591 + $0x6c] sm:$0xf]
    %v620 = vld [vmem:[%s591 + $0x70] sm:$0xf]
    %v621 = vld [vmem:[%s591 + $0x74] sm:$0xf]
    %v622 = vld [vmem:[%s591 + $0x78] sm:$0xf]
    %v623 = vld [vmem:[%s591 + $0x7c] sm:$0xf]
    %v624 = vld [vmem:[%s591 + $0x80] sm:$0xf]
    %v625 = vld [vmem:[%s591 + $0x84] sm:$0xf]
    %v626 = vld [vmem:[%s591 + $0x88] sm:$0xf]
    %v627 = vld [vmem:[%s591 + $0x8c] sm:$0xf]
    %v628 = vld [vmem:[%s591 + $0x90] sm:$0xf]
    %v629 = vld [vmem:[%s591 + $0x94] sm:$0xf]
    %v630 = vld [vmem:[%s591 + $0x98] sm:$0xf]
    %v631 = vld [vmem:[%s591 + $0x9c] sm:$0xf]
    %v632 = vld [vmem:[%s591 + $0xa0] sm:$0xf]
    %v633 = vld [vmem:[%s591 + $0xa4] sm:$0xf]
    %v634 = vld [vmem:[%s591 + $0xa8] sm:$0xf]
    %v635 = vld [vmem:[%s591 + $0xac] sm:$0xf]
    %v636 = vld [vmem:[%s591 + $0xb0] sm:$0xf]
    %v637 = vld [vmem:[%s591 + $0xb4] sm:$0xf]
    %v638 = vld [vmem:[%s591 + $0xb8] sm:$0xf]
    %v639 = vld [vmem:[%s591 + $0xbc] sm:$0xf]
    %v640 = vld [vmem:[%s591 + $0xc0] sm:$0xf]
    %v641 = vld [vmem:[%s591 + $0xc4] sm:$0xf]
    %v642 = vld [vmem:[%s591 + $0xc8] sm:$0xf]
    %v643 = vld [vmem:[%s591 + $0xcc] sm:$0xf]
    %v644 = vld [vmem:[%s591 + $0xd0] sm:$0xf]
    %v645 = vld [vmem:[%s591 + $0xd4] sm:$0xf]
    %v646 = vld [vmem:[%s591 + $0xd8] sm:$0xf]
    %v647 = vld [vmem:[%s591 + $0xdc] sm:$0xf]
    %v648 = vld [vmem:[%s591 + $0xe0] sm:$0xf]
    %v649 = vld [vmem:[%s591 + $0xe4] sm:$0xf]
    %v650 = vld [vmem:[%s591 + $0xe8] sm:$0xf]
    %v651 = vld [vmem:[%s591 + $0xec] sm:$0xf]
    %v652 = vld [vmem:[%s591 + $0xf0] sm:$0xf]
    %v653 = vld [vmem:[%s591 + $0xf4] sm:$0xf]
    %v654 = vld [vmem:[%s591 + $0xf8] sm:$0xf]
    %v655 = vld [vmem:[%s591 + $0xfc] sm:$0xf]
    %v656 = vld [vmem:[%s591 + $0x100] sm:$0xf]
    %v657 = vld [vmem:[%s591 + $0x104] sm:$0xf]
    %v658 = vld [vmem:[%s591 + $0x108] sm:$0xf]
    %v659 = vld [vmem:[%s591 + $0x10c] sm:$0xf]
    %v660 = vld [vmem:[%s591 + $0x110] sm:$0xf]
    %v661 = vld [vmem:[%s591 + $0x114] sm:$0xf]
    %v662 = vld [vmem:[%s591 + $0x118] sm:$0xf]
    %v663 = vld [vmem:[%s591 + $0x11c] sm:$0xf]
    %v664 = vld [vmem:[%s591 + $0x120] sm:$0xf]
    %v665 = vld [vmem:[%s591 + $0x124] sm:$0xf]
    %v666 = vld [vmem:[%s591 + $0x128] sm:$0xf]
    %v667 = vld [vmem:[%s591 + $0x12c] sm:$0xf]
    %v668 = vld [vmem:[%s591 + $0x130] sm:$0xf]
    %v669 = vld [vmem:[%s591 + $0x134] sm:$0xf]
    %v670 = vld [vmem:[%s591 + $0x138] sm:$0xf]
    %v671 = vld [vmem:[%s591 + $0x13c] sm:$0xf]
    %v672 = vld [vmem:[%s591 + $0x140] sm:$0xf]
    %v673 = vld [vmem:[%s591 + $0x144] sm:$0xf]
    %v674 = vld [vmem:[%s591 + $0x148] sm:$0xf]
    %v675 = vld [vmem:[%s591 + $0x14c] sm:$0xf]
    %v676 = vld [vmem:[%s591 + $0x150] sm:$0xf]
    %v677 = vld [vmem:[%s591 + $0x154] sm:$0xf]
    %v678 = vld [vmem:[%s591 + $0x158] sm:$0xf]
    %v679 = vld [vmem:[%s591 + $0x15c] sm:$0xf]
    %v680 = vld [vmem:[%s591 + $0x160] sm:$0xf]
    %v681 = vld [vmem:[%s591 + $0x164] sm:$0xf]
    %v682 = vld [vmem:[%s591 + $0x168] sm:$0xf]
    %v683 = vld [vmem:[%s591 + $0x16c] sm:$0xf]
    %v684 = vld [vmem:[%s591 + $0x170] sm:$0xf]
    %v685 = vld [vmem:[%s591 + $0x174] sm:$0xf]
    %v686 = vld [vmem:[%s591 + $0x178] sm:$0xf]
    %v687 = vld [vmem:[%s591 + $0x17c] sm:$0xf]
    %v688 = vld [vmem:[%s591 + $0x180] sm:$0xf]
    %v689 = vld [vmem:[%s591 + $0x184] sm:$0xf]
    %v690 = vld [vmem:[%s591 + $0x188] sm:$0xf]
    %v691 = vld [vmem:[%s591 + $0x18c] sm:$0xf]
    %v692 = vld [vmem:[%s591 + $0x190] sm:$0xf]
    %v693 = vld [vmem:[%s591 + $0x194] sm:$0xf]
    %v694 = vld [vmem:[%s591 + $0x198] sm:$0xf]
    %v695 = vld [vmem:[%s591 + $0x19c] sm:$0xf]
    %v696 = vld [vmem:[%s591 + $0x1a0] sm:$0xf]
    %v697 = vld [vmem:[%s591 + $0x1a4] sm:$0xf]
    %v698 = vld [vmem:[%s591 + $0x1a8] sm:$0xf]
    %v699 = vld [vmem:[%s591 + $0x1ac] sm:$0xf]
    %v700 = vld [vmem:[%s591 + $0x1b0] sm:$0xf]
    %v701 = vld [vmem:[%s591 + $0x1b4] sm:$0xf]
    %v702 = vld [vmem:[%s591 + $0x1b8] sm:$0xf]
    %v703 = vld [vmem:[%s591 + $0x1bc] sm:$0xf]
    %v704 = vld [vmem:[%s591 + $0x1c0] sm:$0xf]
    %v705 = vld [vmem:[%s591 + $0x1c4] sm:$0xf]
    %v706 = vld [vmem:[%s591 + $0x1c8] sm:$0xf]
    %v707 = vld [vmem:[%s591 + $0x1cc] sm:$0xf]
    %v708 = vld [vmem:[%s591 + $0x1d0] sm:$0xf]
    %v709 = vld [vmem:[%s591 + $0x1d4] sm:$0xf]
    %v710 = vld [vmem:[%s591 + $0x1d8] sm:$0xf]
    %v711 = vld [vmem:[%s591 + $0x1dc] sm:$0xf]
    %v712 = vld [vmem:[%s591 + $0x1e0] sm:$0xf]
    %v713 = vld [vmem:[%s591 + $0x1e4] sm:$0xf]
    %v714 = vld [vmem:[%s591 + $0x1e8] sm:$0xf]
    %v715 = vld [vmem:[%s591 + $0x1ec] sm:$0xf]
    %v716 = vld [vmem:[%s591 + $0x1f0] sm:$0xf]
    %v717 = vld [vmem:[%s591 + $0x1f4] sm:$0xf]
    %v718 = vld [vmem:[%s591 + $0x1f8] sm:$0xf]
    %v719 = vld [vmem:[%s591 + $0x1fc] sm:$0xf]
    %v848 = vunpack.c.l.b16 %v592
    %v849 = vunpack.c.l.b16 %v593
    %v850 = vunpack.c.l.b16 %v594
    %v851 = vunpack.c.l.b16 %v595
    %v852 = vunpack.c.l.b16 %v596
    %v853 = vunpack.c.l.b16 %v597
    %v854 = vunpack.c.l.b16 %v598
    %v855 = vunpack.c.l.b16 %v599
    %v856 = vunpack.c.l.b16 %v600
    %v857 = vunpack.c.l.b16 %v601
    %v858 = vunpack.c.l.b16 %v602
    %v859 = vunpack.c.l.b16 %v603
    %v860 = vunpack.c.l.b16 %v604
    %v861 = vunpack.c.l.b16 %v605
    %v862 = vunpack.c.l.b16 %v606
    %v863 = vunpack.c.l.b16 %v607
    %v864 = vunpack.c.l.b16 %v608
    %v865 = vunpack.c.l.b16 %v609
    %v866 = vunpack.c.l.b16 %v610
    %v867 = vunpack.c.l.b16 %v611
    %v868 = vunpack.c.l.b16 %v612
    %v869 = vunpack.c.l.b16 %v613
    %v870 = vunpack.c.l.b16 %v614
    %v871 = vunpack.c.l.b16 %v615
    %v872 = vunpack.c.l.b16 %v616
    %v873 = vunpack.c.l.b16 %v617
    %v874 = vunpack.c.l.b16 %v618
    %v875 = vunpack.c.l.b16 %v619
    %v876 = vunpack.c.l.b16 %v620
    %v877 = vunpack.c.l.b16 %v621
    %v878 = vunpack.c.l.b16 %v622
    %v879 = vunpack.c.l.b16 %v623
    %v880 = vunpack.c.l.b16 %v624
    %v881 = vunpack.c.l.b16 %v625
    %v882 = vunpack.c.l.b16 %v626
    %v883 = vunpack.c.l.b16 %v627
    %v884 = vunpack.c.l.b16 %v628
    %v885 = vunpack.c.l.b16 %v629
    %v886 = vunpack.c.l.b16 %v630
    %v887 = vunpack.c.l.b16 %v631
    %v888 = vunpack.c.l.b16 %v632
    %v889 = vunpack.c.l.b16 %v633
    %v890 = vunpack.c.l.b16 %v634
    %v891 = vunpack.c.l.b16 %v635
    %v892 = vunpack.c.l.b16 %v636
    %v893 = vunpack.c.l.b16 %v637
    %v894 = vunpack.c.l.b16 %v638
    %v895 = vunpack.c.l.b16 %v639
    %v896 = vunpack.c.l.b16 %v640
    %v897 = vunpack.c.l.b16 %v641
    %v898 = vunpack.c.l.b16 %v642
    %v899 = vunpack.c.l.b16 %v643
    %v900 = vunpack.c.l.b16 %v644
    %v901 = vunpack.c.l.b16 %v645
    %v902 = vunpack.c.l.b16 %v646
    %v903 = vunpack.c.l.b16 %v647
    %v904 = vunpack.c.l.b16 %v648
    %v905 = vunpack.c.l.b16 %v649
    %v906 = vunpack.c.l.b16 %v650
    %v907 = vunpack.c.l.b16 %v651
    %v908 = vunpack.c.l.b16 %v652
    %v909 = vunpack.c.l.b16 %v653
    %v910 = vunpack.c.l.b16 %v654
    %v911 = vunpack.c.l.b16 %v655
    %v912 = vunpack.c.l.b16 %v656
    %v913 = vunpack.c.l.b16 %v657
    %v914 = vunpack.c.l.b16 %v658
    %v915 = vunpack.c.l.b16 %v659
    %v916 = vunpack.c.l.b16 %v660
    %v917 = vunpack.c.l.b16 %v661
    %v918 = vunpack.c.l.b16 %v662
    %v919 = vunpack.c.l.b16 %v663
    %v920 = vunpack.c.l.b16 %v664
    %v921 = vunpack.c.l.b16 %v665
    %v922 = vunpack.c.l.b16 %v666
    %v923 = vunpack.c.l.b16 %v667
    %v924 = vunpack.c.l.b16 %v668
    %v925 = vunpack.c.l.b16 %v669
    %v926 = vunpack.c.l.b16 %v670
    %v927 = vunpack.c.l.b16 %v671
    %v928 = vunpack.c.l.b16 %v672
    %v929 = vunpack.c.l.b16 %v673
    %v930 = vunpack.c.l.b16 %v674
    %v931 = vunpack.c.l.b16 %v675
    %v932 = vunpack.c.l.b16 %v676
    %v933 = vunpack.c.l.b16 %v677
    %v934 = vunpack.c.l.b16 %v678
    %v935 = vunpack.c.l.b16 %v679
    %v936 = vunpack.c.l.b16 %v680
    %v937 = vunpack.c.l.b16 %v681
    %v938 = vunpack.c.l.b16 %v682
    %v939 = vunpack.c.l.b16 %v683
    %v940 = vunpack.c.l.b16 %v684
    %v941 = vunpack.c.l.b16 %v685
    %v942 = vunpack.c.l.b16 %v686
    %v943 = vunpack.c.l.b16 %v687
    %v944 = vunpack.c.l.b16 %v688
    %v945 = vunpack.c.l.b16 %v689
    %v946 = vunpack.c.l.b16 %v690
    %v947 = vunpack.c.l.b16 %v691
    %v948 = vunpack.c.l.b16 %v692
    %v949 = vunpack.c.l.b16 %v693
    %v950 = vunpack.c.l.b16 %v694
    %v951 = vunpack.c.l.b16 %v695
    %v952 = vunpack.c.l.b16 %v696
    %v953 = vunpack.c.l.b16 %v697
    %v954 = vunpack.c.l.b16 %v698
    %v955 = vunpack.c.l.b16 %v699
    %v956 = vunpack.c.l.b16 %v700
    %v957 = vunpack.c.l.b16 %v701
    %v958 = vunpack.c.l.b16 %v702
    %v959 = vunpack.c.l.b16 %v703
    %v960 = vunpack.c.l.b16 %v704
    %v961 = vunpack.c.l.b16 %v705
    %v962 = vunpack.c.l.b16 %v706
    %v963 = vunpack.c.l.b16 %v707
    %v964 = vunpack.c.l.b16 %v708
    %v965 = vunpack.c.l.b16 %v709
    %v966 = vunpack.c.l.b16 %v710
    %v967 = vunpack.c.l.b16 %v711
    %v968 = vunpack.c.l.b16 %v712
    %v969 = vunpack.c.l.b16 %v713
    %v970 = vunpack.c.l.b16 %v714
    %v971 = vunpack.c.l.b16 %v715
    %v972 = vunpack.c.l.b16 %v716
    %v973 = vunpack.c.l.b16 %v717
    %v974 = vunpack.c.l.b16 %v718
    %v975 = vunpack.c.l.b16 %v719
    %v976 = vpack.c.b16 %v849, %v848
    %v977 = vpack.c.b16 %v851, %v850
    %v978 = vpack.c.b16 %v853, %v852
    %v979 = vpack.c.b16 %v855, %v854
    %v980 = vpack.c.b16 %v857, %v856
    %v981 = vpack.c.b16 %v859, %v858
    %v982 = vpack.c.b16 %v861, %v860
    %v983 = vpack.c.b16 %v863, %v862
    %v984 = vpack.c.b16 %v865, %v864
    %v985 = vpack.c.b16 %v867, %v866
    %v986 = vpack.c.b16 %v869, %v868
    %v987 = vpack.c.b16 %v871, %v870
    %v988 = vpack.c.b16 %v873, %v872
    %v989 = vpack.c.b16 %v875, %v874
    %v990 = vpack.c.b16 %v877, %v876
    %v991 = vpack.c.b16 %v879, %v878
    %v992 = vpack.c.b16 %v881, %v880
    %v993 = vpack.c.b16 %v883, %v882
    %v994 = vpack.c.b16 %v885, %v884
    %v995 = vpack.c.b16 %v887, %v886
    %v996 = vpack.c.b16 %v889, %v888
    %v997 = vpack.c.b16 %v891, %v890
    %v998 = vpack.c.b16 %v893, %v892
    %v999 = vpack.c.b16 %v895, %v894
    %v1000 = vpack.c.b16 %v897, %v896
    %v1001 = vpack.c.b16 %v899, %v898
    %v1002 = vpack.c.b16 %v901, %v900
    %v1003 = vpack.c.b16 %v903, %v902
    %v1004 = vpack.c.b16 %v905, %v904
    %v1005 = vpack.c.b16 %v907, %v906
    %v1006 = vpack.c.b16 %v909, %v908
    %v1007 = vpack.c.b16 %v911, %v910
    %v1008 = vpack.c.b16 %v913, %v912
    %v1009 = vpack.c.b16 %v915, %v914
    %v1010 = vpack.c.b16 %v917, %v916
    %v1011 = vpack.c.b16 %v919, %v918
    %v1012 = vpack.c.b16 %v921, %v920
    %v1013 = vpack.c.b16 %v923, %v922
    %v1014 = vpack.c.b16 %v925, %v924
    %v1015 = vpack.c.b16 %v927, %v926
    %v1016 = vpack.c.b16 %v929, %v928
    %v1017 = vpack.c.b16 %v931, %v930
    %v1018 = vpack.c.b16 %v933, %v932
    %v1019 = vpack.c.b16 %v935, %v934
    %v1020 = vpack.c.b16 %v937, %v936
    %v1021 = vpack.c.b16 %v939, %v938
    %v1022 = vpack.c.b16 %v941, %v940
    %v1023 = vpack.c.b16 %v943, %v942
    %v1024 = vpack.c.b16 %v945, %v944
    %v1025 = vpack.c.b16 %v947, %v946
    %v1026 = vpack.c.b16 %v949, %v948
    %v1027 = vpack.c.b16 %v951, %v950
    %v1028 = vpack.c.b16 %v953, %v952
    %v1029 = vpack.c.b16 %v955, %v954
    %v1030 = vpack.c.b16 %v957, %v956
    %v1031 = vpack.c.b16 %v959, %v958
    %v1032 = vpack.c.b16 %v961, %v960
    %v1033 = vpack.c.b16 %v963, %v962
    %v1034 = vpack.c.b16 %v965, %v964
    %v1035 = vpack.c.b16 %v967, %v966
    %v1036 = vpack.c.b16 %v969, %v968
    %v1037 = vpack.c.b16 %v971, %v970
    %v1038 = vpack.c.b16 %v973, %v972
    %v1039 = vpack.c.b16 %v975, %v974
    %1104 = vmatpush.bf16.msra.mxu0 %v983
    %1105 = vmatpush.bf16.msra.mxu0 %v982
    %1106 = vmatpush.bf16.msra.mxu0 %v981
    %1107 = vmatpush.bf16.msra.mxu0 %v980
    %1108 = vmatpush.bf16.msra.mxu0 %v979
    %1109 = vmatpush.bf16.msra.mxu0 %v978
    %1110 = vmatpush.bf16.msra.mxu0 %v977
    %1111 = vmatpush.bf16.msra.mxu0 %v976
    %1112 = vmatmul.bf16.gmra.mxu0 %v583
    %v1113 = vpop.f32.mrf.mxu0
    %v1114 = vadd.f32 0.0, %v1113
    %v1115 = vpop.f32.mrf.mxu0
    %1116 = vdwg.mxu0
    %1117 = vmatpush.bf16.msra.mxu0 %v991
    %1118 = vmatpush.bf16.msra.mxu0 %v990
    %1119 = vmatpush.bf16.msra.mxu0 %v989
    %1120 = vmatpush.bf16.msra.mxu0 %v988
    %1121 = vmatpush.bf16.msra.mxu0 %v987
    %1122 = vmatpush.bf16.msra.mxu0 %v986
    %1123 = vmatpush.bf16.msra.mxu0 %v985
    %1124 = vmatpush.bf16.msra.mxu0 %v984
    %1125 = vmatmul.bf16.gmra.mxu0 %v584
    %v1126 = vpop.f32.mrf.mxu0
    %v1127 = vadd.f32 %v1114, %v1126
    %v1128 = vpop.f32.mrf.mxu0
    %1129 = vdwg.mxu0
    %1130 = vmatpush.bf16.msra.mxu0 %v999
    %1131 = vmatpush.bf16.msra.mxu0 %v998
    %1132 = vmatpush.bf16.msra.mxu0 %v997
    %1133 = vmatpush.bf16.msra.mxu0 %v996
    %1134 = vmatpush.bf16.msra.mxu0 %v995
    %1135 = vmatpush.bf16.msra.mxu0 %v994
    %1136 = vmatpush.bf16.msra.mxu0 %v993
    %1137 = vmatpush.bf16.msra.mxu0 %v992
    %1138 = vmatmul.bf16.gmra.mxu0 %v585
    %v1139 = vpop.f32.mrf.mxu0
    %v1140 = vadd.f32 %v1127, %v1139
    %v1141 = vpop.f32.mrf.mxu0
    %1142 = vdwg.mxu0
    %1143 = vmatpush.bf16.msra.mxu0 %v1007
    %1144 = vmatpush.bf16.msra.mxu0 %v1006
    %1145 = vmatpush.bf16.msra.mxu0 %v1005
    %1146 = vmatpush.bf16.msra.mxu0 %v1004
    %1147 = vmatpush.bf16.msra.mxu0 %v1003
    %1148 = vmatpush.bf16.msra.mxu0 %v1002
    %1149 = vmatpush.bf16.msra.mxu0 %v1001
    %1150 = vmatpush.bf16.msra.mxu0 %v1000
    %1151 = vmatmul.bf16.gmra.mxu0 %v586
    %v1152 = vpop.f32.mrf.mxu0
    %v1153 = vadd.f32 %v1140, %v1152
    %v1154 = vpop.f32.mrf.mxu0
    %1155 = vdwg.mxu0
    %1156 = vmatpush.bf16.msra.mxu0 %v1015
    %1157 = vmatpush.bf16.msra.mxu0 %v1014
    %1158 = vmatpush.bf16.msra.mxu0 %v1013
    %1159 = vmatpush.bf16.msra.mxu0 %v1012
    %1160 = vmatpush.bf16.msra.mxu0 %v1011
    %1161 = vmatpush.bf16.msra.mxu0 %v1010
    %1162 = vmatpush.bf16.msra.mxu0 %v1009
    %1163 = vmatpush.bf16.msra.mxu0 %v1008
    %1164 = vmatmul.bf16.gmra.mxu0 %v587
    %v1165 = vpop.f32.mrf.mxu0
    %v1166 = vadd.f32 %v1153, %v1165
    %v1167 = vpop.f32.mrf.mxu0
    %1168 = vdwg.mxu0
    %1169 = vmatpush.bf16.msra.mxu0 %v1023
    %1170 = vmatpush.bf16.msra.mxu0 %v1022
    %1171 = vmatpush.bf16.msra.mxu0 %v1021
    %1172 = vmatpush.bf16.msra.mxu0 %v1020
    %1173 = vmatpush.bf16.msra.mxu0 %v1019
    %1174 = vmatpush.bf16.msra.mxu0 %v1018
    %1175 = vmatpush.bf16.msra.mxu0 %v1017
    %1176 = vmatpush.bf16.msra.mxu0 %v1016
    %1177 = vmatmul.bf16.gmra.mxu0 %v588
    %v1178 = vpop.f32.mrf.mxu0
    %v1179 = vadd.f32 %v1166, %v1178
    %v1180 = vpop.f32.mrf.mxu0
    %1181 = vdwg.mxu0
    %1182 = vmatpush.bf16.msra.mxu0 %v1031
    %1183 = vmatpush.bf16.msra.mxu0 %v1030
    %1184 = vmatpush.bf16.msra.mxu0 %v1029
    %1185 = vmatpush.bf16.msra.mxu0 %v1028
    %1186 = vmatpush.bf16.msra.mxu0 %v1027
    %1187 = vmatpush.bf16.msra.mxu0 %v1026
    %1188 = vmatpush.bf16.msra.mxu0 %v1025
    %1189 = vmatpush.bf16.msra.mxu0 %v1024
    %1190 = vmatmul.bf16.gmra.mxu0 %v589
    %v1191 = vpop.f32.mrf.mxu0
    %v1192 = vadd.f32 %v1179, %v1191
    %v1193 = vpop.f32.mrf.mxu0
    %1194 = vdwg.mxu0
    %1195 = vmatpush.bf16.msra.mxu0 %v1039
    %1196 = vmatpush.bf16.msra.mxu0 %v1038
    %1197 = vmatpush.bf16.msra.mxu0 %v1037
    %1198 = vmatpush.bf16.msra.mxu0 %v1036
    %1199 = vmatpush.bf16.msra.mxu0 %v1035
    %1200 = vmatpush.bf16.msra.mxu0 %v1034
    %1201 = vmatpush.bf16.msra.mxu0 %v1033
    %1202 = vmatpush.bf16.msra.mxu0 %v1032
    %1203 = vmatmul.bf16.gmra.mxu0 %v590
    %v1204 = vpop.f32.mrf.mxu0
    %v1205 = vadd.f32 %v1192, %v1204
    %v1206 = vpop.f32.mrf.mxu0
    %1207 = vdwg.mxu0
    %v1336 = vunpack.c.l.b16 %v253
    %v1337 = vunpack.c.l.b16 %v254
    %v1338 = vunpack.c.l.b16 %v255
    %v1339 = vunpack.c.l.b16 %v256
    %v1340 = vunpack.c.l.b16 %v257
    %v1341 = vunpack.c.l.b16 %v258
    %v1342 = vunpack.c.l.b16 %v259
    %v1343 = vunpack.c.l.b16 %v260
    %v1344 = vunpack.c.l.b16 %v261
    %v1345 = vunpack.c.l.b16 %v262
    %v1346 = vunpack.c.l.b16 %v263
    %v1347 = vunpack.c.l.b16 %v264
    %v1348 = vunpack.c.l.b16 %v265
    %v1349 = vunpack.c.l.b16 %v266
    %v1350 = vunpack.c.l.b16 %v267
    %v1351 = vunpack.c.l.b16 %v268
    %v1352 = vunpack.c.l.b16 %v269
    %v1353 = vunpack.c.l.b16 %v270
    %v1354 = vunpack.c.l.b16 %v271
    %v1355 = vunpack.c.l.b16 %v272
    %v1356 = vunpack.c.l.b16 %v273
    %v1357 = vunpack.c.l.b16 %v274
    %v1358 = vunpack.c.l.b16 %v275
    %v1359 = vunpack.c.l.b16 %v276
    %v1360 = vunpack.c.l.b16 %v277
    %v1361 = vunpack.c.l.b16 %v278
    %v1362 = vunpack.c.l.b16 %v279
    %v1363 = vunpack.c.l.b16 %v280
    %v1364 = vunpack.c.l.b16 %v281
    %v1365 = vunpack.c.l.b16 %v282
    %v1366 = vunpack.c.l.b16 %v283
    %v1367 = vunpack.c.l.b16 %v284
    %v1368 = vunpack.c.l.b16 %v285
    %v1369 = vunpack.c.l.b16 %v286
    %v1370 = vunpack.c.l.b16 %v287
    %v1371 = vunpack.c.l.b16 %v288
    %v1372 = vunpack.c.l.b16 %v289
    %v1373 = vunpack.c.l.b16 %v290
    %v1374 = vunpack.c.l.b16 %v291
    %v1375 = vunpack.c.l.b16 %v292
    %v1376 = vunpack.c.l.b16 %v293
    %v1377 = vunpack.c.l.b16 %v294
    %v1378 = vunpack.c.l.b16 %v295
    %v1379 = vunpack.c.l.b16 %v296
    %v1380 = vunpack.c.l.b16 %v297
    %v1381 = vunpack.c.l.b16 %v298
    %v1382 = vunpack.c.l.b16 %v299
    %v1383 = vunpack.c.l.b16 %v300
    %v1384 = vunpack.c.l.b16 %v301
    %v1385 = vunpack.c.l.b16 %v302
    %v1386 = vunpack.c.l.b16 %v303
    %v1387 = vunpack.c.l.b16 %v304
    %v1388 = vunpack.c.l.b16 %v305
    %v1389 = vunpack.c.l.b16 %v306
    %v1390 = vunpack.c.l.b16 %v307
    %v1391 = vunpack.c.l.b16 %v308
    %v1392 = vunpack.c.l.b16 %v309
    %v1393 = vunpack.c.l.b16 %v310
    %v1394 = vunpack.c.l.b16 %v311
    %v1395 = vunpack.c.l.b16 %v312
    %v1396 = vunpack.c.l.b16 %v313
    %v1397 = vunpack.c.l.b16 %v314
    %v1398 = vunpack.c.l.b16 %v315
    %v1399 = vunpack.c.l.b16 %v316
    %v1400 = vunpack.c.l.b16 %v317
    %v1401 = vunpack.c.l.b16 %v318
    %v1402 = vunpack.c.l.b16 %v319
    %v1403 = vunpack.c.l.b16 %v320
    %v1404 = vunpack.c.l.b16 %v321
    %v1405 = vunpack.c.l.b16 %v322
    %v1406 = vunpack.c.l.b16 %v323
    %v1407 = vunpack.c.l.b16 %v324
    %v1408 = vunpack.c.l.b16 %v325
    %v1409 = vunpack.c.l.b16 %v326
    %v1410 = vunpack.c.l.b16 %v327
    %v1411 = vunpack.c.l.b16 %v328
    %v1412 = vunpack.c.l.b16 %v329
    %v1413 = vunpack.c.l.b16 %v330
    %v1414 = vunpack.c.l.b16 %v331
    %v1415 = vunpack.c.l.b16 %v332
    %v1416 = vunpack.c.l.b16 %v333
    %v1417 = vunpack.c.l.b16 %v334
    %v1418 = vunpack.c.l.b16 %v335
    %v1419 = vunpack.c.l.b16 %v336
    %v1420 = vunpack.c.l.b16 %v337
    %v1421 = vunpack.c.l.b16 %v338
    %v1422 = vunpack.c.l.b16 %v339
    %v1423 = vunpack.c.l.b16 %v340
    %v1424 = vunpack.c.l.b16 %v341
    %v1425 = vunpack.c.l.b16 %v342
    %v1426 = vunpack.c.l.b16 %v343
    %v1427 = vunpack.c.l.b16 %v344
    %v1428 = vunpack.c.l.b16 %v345
    %v1429 = vunpack.c.l.b16 %v346
    %v1430 = vunpack.c.l.b16 %v347
    %v1431 = vunpack.c.l.b16 %v348
    %v1432 = vunpack.c.l.b16 %v349
    %v1433 = vunpack.c.l.b16 %v350
    %v1434 = vunpack.c.l.b16 %v351
    %v1435 = vunpack.c.l.b16 %v352
    %v1436 = vunpack.c.l.b16 %v353
    %v1437 = vunpack.c.l.b16 %v354
    %v1438 = vunpack.c.l.b16 %v355
    %v1439 = vunpack.c.l.b16 %v356
    %v1440 = vunpack.c.l.b16 %v357
    %v1441 = vunpack.c.l.b16 %v358
    %v1442 = vunpack.c.l.b16 %v359
    %v1443 = vunpack.c.l.b16 %v360
    %v1444 = vunpack.c.l.b16 %v361
    %v1445 = vunpack.c.l.b16 %v362
    %v1446 = vunpack.c.l.b16 %v363
    %v1447 = vunpack.c.l.b16 %v364
    %v1448 = vunpack.c.l.b16 %v365
    %v1449 = vunpack.c.l.b16 %v366
    %v1450 = vunpack.c.l.b16 %v367
    %v1451 = vunpack.c.l.b16 %v368
    %v1452 = vunpack.c.l.b16 %v369
    %v1453 = vunpack.c.l.b16 %v370
    %v1454 = vunpack.c.l.b16 %v371
    %v1455 = vunpack.c.l.b16 %v372
    %v1456 = vunpack.c.l.b16 %v373
    %v1457 = vunpack.c.l.b16 %v374
    %v1458 = vunpack.c.l.b16 %v375
    %v1459 = vunpack.c.l.b16 %v376
    %v1460 = vunpack.c.l.b16 %v377
    %v1461 = vunpack.c.l.b16 %v378
    %v1462 = vunpack.c.l.b16 %v379
    %v1463 = vunpack.c.l.b16 %v380
    %v1464 = vpack.c.b16 %v1337, %v1336
    %v1465 = vpack.c.b16 %v1339, %v1338
    %v1466 = vpack.c.b16 %v1341, %v1340
    %v1467 = vpack.c.b16 %v1343, %v1342
    %v1468 = vpack.c.b16 %v1345, %v1344
    %v1469 = vpack.c.b16 %v1347, %v1346
    %v1470 = vpack.c.b16 %v1349, %v1348
    %v1471 = vpack.c.b16 %v1351, %v1350
    %v1472 = vpack.c.b16 %v1353, %v1352
    %v1473 = vpack.c.b16 %v1355, %v1354
    %v1474 = vpack.c.b16 %v1357, %v1356
    %v1475 = vpack.c.b16 %v1359, %v1358
    %v1476 = vpack.c.b16 %v1361, %v1360
    %v1477 = vpack.c.b16 %v1363, %v1362
    %v1478 = vpack.c.b16 %v1365, %v1364
    %v1479 = vpack.c.b16 %v1367, %v1366
    %v1480 = vpack.c.b16 %v1369, %v1368
    %v1481 = vpack.c.b16 %v1371, %v1370
    %v1482 = vpack.c.b16 %v1373, %v1372
    %v1483 = vpack.c.b16 %v1375, %v1374
    %v1484 = vpack.c.b16 %v1377, %v1376
    %v1485 = vpack.c.b16 %v1379, %v1378
    %v1486 = vpack.c.b16 %v1381, %v1380
    %v1487 = vpack.c.b16 %v1383, %v1382
    %v1488 = vpack.c.b16 %v1385, %v1384
    %v1489 = vpack.c.b16 %v1387, %v1386
    %v1490 = vpack.c.b16 %v1389, %v1388
    %v1491 = vpack.c.b16 %v1391, %v1390
    %v1492 = vpack.c.b16 %v1393, %v1392
    %v1493 = vpack.c.b16 %v1395, %v1394
    %v1494 = vpack.c.b16 %v1397, %v1396
    %v1495 = vpack.c.b16 %v1399, %v1398
    %v1496 = vpack.c.b16 %v1401, %v1400
    %v1497 = vpack.c.b16 %v1403, %v1402
    %v1498 = vpack.c.b16 %v1405, %v1404
    %v1499 = vpack.c.b16 %v1407, %v1406
    %v1500 = vpack.c.b16 %v1409, %v1408
    %v1501 = vpack.c.b16 %v1411, %v1410
    %v1502 = vpack.c.b16 %v1413, %v1412
    %v1503 = vpack.c.b16 %v1415, %v1414
    %v1504 = vpack.c.b16 %v1417, %v1416
    %v1505 = vpack.c.b16 %v1419, %v1418
    %v1506 = vpack.c.b16 %v1421, %v1420
    %v1507 = vpack.c.b16 %v1423, %v1422
    %v1508 = vpack.c.b16 %v1425, %v1424
    %v1509 = vpack.c.b16 %v1427, %v1426
    %v1510 = vpack.c.b16 %v1429, %v1428
    %v1511 = vpack.c.b16 %v1431, %v1430
    %v1512 = vpack.c.b16 %v1433, %v1432
    %v1513 = vpack.c.b16 %v1435, %v1434
    %v1514 = vpack.c.b16 %v1437, %v1436
    %v1515 = vpack.c.b16 %v1439, %v1438
    %v1516 = vpack.c.b16 %v1441, %v1440
    %v1517 = vpack.c.b16 %v1443, %v1442
    %v1518 = vpack.c.b16 %v1445, %v1444
    %v1519 = vpack.c.b16 %v1447, %v1446
    %v1520 = vpack.c.b16 %v1449, %v1448
    %v1521 = vpack.c.b16 %v1451, %v1450
    %v1522 = vpack.c.b16 %v1453, %v1452
    %v1523 = vpack.c.b16 %v1455, %v1454
    %v1524 = vpack.c.b16 %v1457, %v1456
    %v1525 = vpack.c.b16 %v1459, %v1458
    %v1526 = vpack.c.b16 %v1461, %v1460
    %v1527 = vpack.c.b16 %v1463, %v1462
    %1592 = vmatpush.bf16.msra.mxu0 %v1471
    %1593 = vmatpush.bf16.msra.mxu0 %v1470
    %1594 = vmatpush.bf16.msra.mxu0 %v1469
    %1595 = vmatpush.bf16.msra.mxu0 %v1468
    %1596 = vmatpush.bf16.msra.mxu0 %v1467
    %1597 = vmatpush.bf16.msra.mxu0 %v1466
    %1598 = vmatpush.bf16.msra.mxu0 %v1465
    %1599 = vmatpush.bf16.msra.mxu0 %v1464
    %1600 = vmatmul.bf16.gmra.mxu0 %v245
    %v1601 = vpop.f32.mrf.mxu0
    %v1602 = vadd.f32 %v1205, %v1601
    %v1603 = vpop.f32.mrf.mxu0
    %1604 = vdwg.mxu0
    %1605 = vmatpush.bf16.msra.mxu0 %v1479
    %1606 = vmatpush.bf16.msra.mxu0 %v1478
    %1607 = vmatpush.bf16.msra.mxu0 %v1477
    %1608 = vmatpush.bf16.msra.mxu0 %v1476
    %1609 = vmatpush.bf16.msra.mxu0 %v1475
    %1610 = vmatpush.bf16.msra.mxu0 %v1474
    %1611 = vmatpush.bf16.msra.mxu0 %v1473
    %1612 = vmatpush.bf16.msra.mxu0 %v1472
    %1613 = vmatmul.bf16.gmra.mxu0 %v246
    %v1614 = vpop.f32.mrf.mxu0
    %v1615 = vadd.f32 %v1602, %v1614
    %v1616 = vpop.f32.mrf.mxu0
    %1617 = vdwg.mxu0
    %1618 = vmatpush.bf16.msra.mxu0 %v1487
    %1619 = vmatpush.bf16.msra.mxu0 %v1486
    %1620 = vmatpush.bf16.msra.mxu0 %v1485
    %1621 = vmatpush.bf16.msra.mxu0 %v1484
    %1622 = vmatpush.bf16.msra.mxu0 %v1483
    %1623 = vmatpush.bf16.msra.mxu0 %v1482
    %1624 = vmatpush.bf16.msra.mxu0 %v1481
    %1625 = vmatpush.bf16.msra.mxu0 %v1480
    %1626 = vmatmul.bf16.gmra.mxu0 %v247
    %v1627 = vpop.f32.mrf.mxu0
    %v1628 = vadd.f32 %v1615, %v1627
    %v1629 = vpop.f32.mrf.mxu0
    %1630 = vdwg.mxu0
    %1631 = vmatpush.bf16.msra.mxu0 %v1495
    %1632 = vmatpush.bf16.msra.mxu0 %v1494
    %1633 = vmatpush.bf16.msra.mxu0 %v1493
    %1634 = vmatpush.bf16.msra.mxu0 %v1492
    %1635 = vmatpush.bf16.msra.mxu0 %v1491
    %1636 = vmatpush.bf16.msra.mxu0 %v1490
    %1637 = vmatpush.bf16.msra.mxu0 %v1489
    %1638 = vmatpush.bf16.msra.mxu0 %v1488
    %1639 = vmatmul.bf16.gmra.mxu0 %v248
    %v1640 = vpop.f32.mrf.mxu0
    %v1641 = vadd.f32 %v1628, %v1640
    %v1642 = vpop.f32.mrf.mxu0
    %1643 = vdwg.mxu0
    %1644 = vmatpush.bf16.msra.mxu0 %v1503
    %1645 = vmatpush.bf16.msra.mxu0 %v1502
    %1646 = vmatpush.bf16.msra.mxu0 %v1501
    %1647 = vmatpush.bf16.msra.mxu0 %v1500
    %1648 = vmatpush.bf16.msra.mxu0 %v1499
    %1649 = vmatpush.bf16.msra.mxu0 %v1498
    %1650 = vmatpush.bf16.msra.mxu0 %v1497
    %1651 = vmatpush.bf16.msra.mxu0 %v1496
    %1652 = vmatmul.bf16.gmra.mxu0 %v249
    %v1653 = vpop.f32.mrf.mxu0
    %v1654 = vadd.f32 %v1641, %v1653
    %v1655 = vpop.f32.mrf.mxu0
    %1656 = vdwg.mxu0
    %1657 = vmatpush.bf16.msra.mxu0 %v1511
    %1658 = vmatpush.bf16.msra.mxu0 %v1510
    %1659 = vmatpush.bf16.msra.mxu0 %v1509
    %1660 = vmatpush.bf16.msra.mxu0 %v1508
    %1661 = vmatpush.bf16.msra.mxu0 %v1507
    %1662 = vmatpush.bf16.msra.mxu0 %v1506
    %1663 = vmatpush.bf16.msra.mxu0 %v1505
    %1664 = vmatpush.bf16.msra.mxu0 %v1504
    %1665 = vmatmul.bf16.gmra.mxu0 %v250
    %v1666 = vpop.f32.mrf.mxu0
    %v1667 = vadd.f32 %v1654, %v1666
    %v1668 = vpop.f32.mrf.mxu0
    %1669 = vdwg.mxu0
    %1670 = vmatpush.bf16.msra.mxu0 %v1519
    %1671 = vmatpush.bf16.msra.mxu0 %v1518
    %1672 = vmatpush.bf16.msra.mxu0 %v1517
    %1673 = vmatpush.bf16.msra.mxu0 %v1516
    %1674 = vmatpush.bf16.msra.mxu0 %v1515
    %1675 = vmatpush.bf16.msra.mxu0 %v1514
    %1676 = vmatpush.bf16.msra.mxu0 %v1513
    %1677 = vmatpush.bf16.msra.mxu0 %v1512
    %1678 = vmatmul.bf16.gmra.mxu0 %v251
    %v1679 = vpop.f32.mrf.mxu0
    %v1680 = vadd.f32 %v1667, %v1679
    %v1681 = vpop.f32.mrf.mxu0
    %1682 = vdwg.mxu0
    %1683 = vmatpush.bf16.msra.mxu0 %v1527
    %1684 = vmatpush.bf16.msra.mxu0 %v1526
    %1685 = vmatpush.bf16.msra.mxu0 %v1525
    %1686 = vmatpush.bf16.msra.mxu0 %v1524
    %1687 = vmatpush.bf16.msra.mxu0 %v1523
    %1688 = vmatpush.bf16.msra.mxu0 %v1522
    %1689 = vmatpush.bf16.msra.mxu0 %v1521
    %1690 = vmatpush.bf16.msra.mxu0 %v1520
    %1691 = vmatmul.bf16.gmra.mxu0 %v252
    %v1692 = vpop.f32.mrf.mxu0
    %v1693 = vadd.f32 %v1680, %v1692
    %v1694 = vpop.f32.mrf.mxu0
    %1695 = vdwg.mxu0
    %s1696 = scalar_lea.vmem %s0, 4
    %v1697 = vld [vmem:[%s1696] sm:$0x3]
    %v1698 = vpack.c.bf16 %v1697, %v1697
    %s1699 = scalar_lea.vmem %s1, 128
    %v1700 = vld [vmem:[%s1699] sm:$0xff]
    %v1701 = vld [vmem:[%s1699 + $0x8] sm:$0xff]
    %v1702 = vld [vmem:[%s1699 + $0x10] sm:$0xff]
    %v1703 = vld [vmem:[%s1699 + $0x18] sm:$0xff]
    %v1704 = vld [vmem:[%s1699 + $0x20] sm:$0x11]
    %v1705 = vld [vmem:[%s1699 + $0x28] sm:$0x11]
    %v1706 = vld [vmem:[%s1699 + $0x30] sm:$0x11]
    %v1707 = vld [vmem:[%s1699 + $0x38] sm:$0x11]
    %s1708 = scalar_lea.vmem %s2, 2
    %v1709 = vld [vmem:[%s1708] ss:$4 sm:$0xff]
    %v1711 = vperm.slane %v1709, 0
    %v1712 = vperm.slane %v1709, 1
    %v1713 = vperm.slane %v1709, 2
    %v1714 = vperm.slane %v1709, 3
    %v1715 = vperm.slane %v1709, 4
    %v1716 = vperm.slane %v1709, 5
    %v1717 = vperm.slane %v1709, 6
    %v1718 = vperm.slane %v1709, 7
    %v1735 = vunpack.c.l.b16 %v1700
    %v1736 = vunpack.c.h.b16 %v1700
    %v1737 = vunpack.c.l.b16 %v1701
    %v1738 = vunpack.c.h.b16 %v1701
    %v1739 = vunpack.c.l.b16 %v1702
    %v1740 = vunpack.c.h.b16 %v1702
    %v1741 = vunpack.c.l.b16 %v1703
    %v1742 = vunpack.c.h.b16 %v1703
    %v1743 = vunpack.c.l.b16 %v1704
    %v1744 = vunpack.c.h.b16 %v1704
    %v1745 = vunpack.c.l.b16 %v1705
    %v1746 = vunpack.c.h.b16 %v1705
    %v1747 = vunpack.c.l.b16 %v1706
    %v1748 = vunpack.c.h.b16 %v1706
    %v1749 = vunpack.c.l.b16 %v1707
    %v1750 = vunpack.c.h.b16 %v1707
    %v1751 = vpack.c.b16 %v1743, %v1735
    %v1752 = vpack.c.b16 %v1744, %v1736
    %v1753 = vpack.c.b16 %v1745, %v1737
    %v1754 = vpack.c.b16 %v1746, %v1738
    %v1755 = vpack.c.b16 %v1747, %v1739
    %v1756 = vpack.c.b16 %v1748, %v1740
    %v1757 = vpack.c.b16 %v1749, %v1741
    %v1758 = vpack.c.b16 %v1750, %v1742
    %v1760 = vsel %vm104, %v1698, 0
    %v1763 = vsel %vm108, %v1751, 0
    %v1766 = vsel %vm108, %v1752, 0
    %v1769 = vsel %vm108, %v1753, 0
    %v1772 = vsel %vm108, %v1754, 0
    %v1775 = vsel %vm108, %v1755, 0
    %v1778 = vsel %vm108, %v1756, 0
    %v1781 = vsel %vm108, %v1757, 0
    %v1784 = vsel %vm108, %v1758, 0
    %1786 = vmatpush.bf16.msra.mxu0 0
    %1787 = vmatpush.bf16.msra.mxu0 0
    %1788 = vmatpush.bf16.msra.mxu0 0
    %1789 = vmatpush.bf16.msra.mxu0 0
    %1790 = vmatpush.bf16.msra.mxu0 0
    %1791 = vmatpush.bf16.msra.mxu0 0
    %1792 = vmatpush.bf16.msra.mxu0 0
    %1793 = vmatpush.bf16.msra.mxu0 %v1763
    %1794 = vmatmul.bf16.gmra.mxu0 %v1760
    %v1795 = vpop.f32.mrf.mxu0
    %v1796 = vadd.f32 %v1711, %v1795
    %v1797 = vpop.f32.mrf.mxu0
    %1798 = vdwg.mxu0
    %1799 = vmatpush.bf16.msra.mxu0 0
    %1800 = vmatpush.bf16.msra.mxu0 0
    %1801 = vmatpush.bf16.msra.mxu0 0
    %1802 = vmatpush.bf16.msra.mxu0 0
    %1803 = vmatpush.bf16.msra.mxu0 0
    %1804 = vmatpush.bf16.msra.mxu0 0
    %1805 = vmatpush.bf16.msra.mxu0 0
    %1806 = vmatpush.bf16.msra.mxu0 %v1766
    %1807 = vmatmul.bf16.gmra.mxu0 %v1760
    %v1808 = vpop.f32.mrf.mxu0
    %v1809 = vadd.f32 %v1712, %v1808
    %v1810 = vpop.f32.mrf.mxu0
    %1811 = vdwg.mxu0
    %1812 = vmatpush.bf16.msra.mxu0 0
    %1813 = vmatpush.bf16.msra.mxu0 0
    %1814 = vmatpush.bf16.msra.mxu0 0
    %1815 = vmatpush.bf16.msra.mxu0 0
    %1816 = vmatpush.bf16.msra.mxu0 0
    %1817 = vmatpush.bf16.msra.mxu0 0
    %1818 = vmatpush.bf16.msra.mxu0 0
    %1819 = vmatpush.bf16.msra.mxu0 %v1769
    %1820 = vmatmul.bf16.gmra.mxu0 %v1760
    %v1821 = vpop.f32.mrf.mxu0
    %v1822 = vadd.f32 %v1713, %v1821
    %v1823 = vpop.f32.mrf.mxu0
    %1824 = vdwg.mxu0
    %1825 = vmatpush.bf16.msra.mxu0 0
    %1826 = vmatpush.bf16.msra.mxu0 0
    %1827 = vmatpush.bf16.msra.mxu0 0
    %1828 = vmatpush.bf16.msra.mxu0 0
    %1829 = vmatpush.bf16.msra.mxu0 0
    %1830 = vmatpush.bf16.msra.mxu0 0
    %1831 = vmatpush.bf16.msra.mxu0 0
    %1832 = vmatpush.bf16.msra.mxu0 %v1772
    %1833 = vmatmul.bf16.gmra.mxu0 %v1760
    %v1834 = vpop.f32.mrf.mxu0
    %v1835 = vadd.f32 %v1714, %v1834
    %v1836 = vpop.f32.mrf.mxu0
    %1837 = vdwg.mxu0
    %1838 = vmatpush.bf16.msra.mxu0 0
    %1839 = vmatpush.bf16.msra.mxu0 0
    %1840 = vmatpush.bf16.msra.mxu0 0
    %1841 = vmatpush.bf16.msra.mxu0 0
    %1842 = vmatpush.bf16.msra.mxu0 0
    %1843 = vmatpush.bf16.msra.mxu0 0
    %1844 = vmatpush.bf16.msra.mxu0 0
    %1845 = vmatpush.bf16.msra.mxu0 %v1775
    %1846 = vmatmul.bf16.gmra.mxu0 %v1760
    %v1847 = vpop.f32.mrf.mxu0
    %v1848 = vadd.f32 %v1715, %v1847
    %v1849 = vpop.f32.mrf.mxu0
    %1850 = vdwg.mxu0
    %1851 = vmatpush.bf16.msra.mxu0 0
    %1852 = vmatpush.bf16.msra.mxu0 0
    %1853 = vmatpush.bf16.msra.mxu0 0
    %1854 = vmatpush.bf16.msra.mxu0 0
    %1855 = vmatpush.bf16.msra.mxu0 0
    %1856 = vmatpush.bf16.msra.mxu0 0
    %1857 = vmatpush.bf16.msra.mxu0 0
    %1858 = vmatpush.bf16.msra.mxu0 %v1778
    %1859 = vmatmul.bf16.gmra.mxu0 %v1760
    %v1860 = vpop.f32.mrf.mxu0
    %v1861 = vadd.f32 %v1716, %v1860
    %v1862 = vpop.f32.mrf.mxu0
    %1863 = vdwg.mxu0
    %1864 = vmatpush.bf16.msra.mxu0 0
    %1865 = vmatpush.bf16.msra.mxu0 0
    %1866 = vmatpush.bf16.msra.mxu0 0
    %1867 = vmatpush.bf16.msra.mxu0 0
    %1868 = vmatpush.bf16.msra.mxu0 0
    %1869 = vmatpush.bf16.msra.mxu0 0
    %1870 = vmatpush.bf16.msra.mxu0 0
    %1871 = vmatpush.bf16.msra.mxu0 %v1781
    %1872 = vmatmul.bf16.gmra.mxu0 %v1760
    %v1873 = vpop.f32.mrf.mxu0
    %v1874 = vadd.f32 %v1717, %v1873
    %v1875 = vpop.f32.mrf.mxu0
    %1876 = vdwg.mxu0
    %1877 = vmatpush.bf16.msra.mxu0 0
    %1878 = vmatpush.bf16.msra.mxu0 0
    %1879 = vmatpush.bf16.msra.mxu0 0
    %1880 = vmatpush.bf16.msra.mxu0 0
    %1881 = vmatpush.bf16.msra.mxu0 0
    %1882 = vmatpush.bf16.msra.mxu0 0
    %1883 = vmatpush.bf16.msra.mxu0 0
    %1884 = vmatpush.bf16.msra.mxu0 %v1784
    %1885 = vmatmul.bf16.gmra.mxu0 %v1760
    %v1886 = vpop.f32.mrf.mxu0
    %v1887 = vadd.f32 %v1718, %v1886
    %v1888 = vpop.f32.mrf.mxu0
    %1889 = vdwg.mxu0
    %v1890 = vmax.f32 %v1796, 0.0
    %v1891 = vmax.f32 %v1809, 0.0
    %v1892 = vmax.f32 %v1822, 0.0
    %v1893 = vmax.f32 %v1835, 0.0
    %v1894 = vmax.f32 %v1848, 0.0
    %v1895 = vmax.f32 %v1861, 0.0
    %v1896 = vmax.f32 %v1874, 0.0
    %v1897 = vmax.f32 %v1887, 0.0
    %v1898 = vpack.c.bf16 %v1890, %v1890
    %v1899 = vpack.c.bf16 %v1891, %v1891
    %v1900 = vpack.c.bf16 %v1892, %v1892
    %v1901 = vpack.c.bf16 %v1893, %v1893
    %v1902 = vpack.c.bf16 %v1894, %v1894
    %v1903 = vpack.c.bf16 %v1895, %v1895
    %v1904 = vpack.c.bf16 %v1896, %v1896
    %v1905 = vpack.c.bf16 %v1897, %v1897
    %s1906 = scalar_lea.vmem [#allocation2], 1024
    %v1907 = vld [vmem:[%s1906] sm:$0xf]
    %v1908 = vld [vmem:[%s1906 + $0x4] sm:$0xf]
    %v1909 = vld [vmem:[%s1906 + $0x8] sm:$0xf]
    %v1910 = vld [vmem:[%s1906 + $0xc] sm:$0xf]
    %v1911 = vld [vmem:[%s1906 + $0x10] sm:$0xf]
    %v1912 = vld [vmem:[%s1906 + $0x14] sm:$0xf]
    %v1913 = vld [vmem:[%s1906 + $0x18] sm:$0xf]
    %v1914 = vld [vmem:[%s1906 + $0x1c] sm:$0xf]
    %v1915 = vld [vmem:[%s1906 + $0x20] sm:$0xf]
    %v1916 = vld [vmem:[%s1906 + $0x24] sm:$0xf]
    %v1917 = vld [vmem:[%s1906 + $0x28] sm:$0xf]
    %v1918 = vld [vmem:[%s1906 + $0x2c] sm:$0xf]
    %v1919 = vld [vmem:[%s1906 + $0x30] sm:$0xf]
    %v1920 = vld [vmem:[%s1906 + $0x34] sm:$0xf]
    %v1921 = vld [vmem:[%s1906 + $0x38] sm:$0xf]
    %v1922 = vld [vmem:[%s1906 + $0x3c] sm:$0xf]
    %v1923 = vld [vmem:[%s1906 + $0x40] sm:$0xf]
    %v1924 = vld [vmem:[%s1906 + $0x44] sm:$0xf]
    %v1925 = vld [vmem:[%s1906 + $0x48] sm:$0xf]
    %v1926 = vld [vmem:[%s1906 + $0x4c] sm:$0xf]
    %v1927 = vld [vmem:[%s1906 + $0x50] sm:$0xf]
    %v1928 = vld [vmem:[%s1906 + $0x54] sm:$0xf]
    %v1929 = vld [vmem:[%s1906 + $0x58] sm:$0xf]
    %v1930 = vld [vmem:[%s1906 + $0x5c] sm:$0xf]
    %v1931 = vld [vmem:[%s1906 + $0x60] sm:$0xf]
    %v1932 = vld [vmem:[%s1906 + $0x64] sm:$0xf]
    %v1933 = vld [vmem:[%s1906 + $0x68] sm:$0xf]
    %v1934 = vld [vmem:[%s1906 + $0x6c] sm:$0xf]
    %v1935 = vld [vmem:[%s1906 + $0x70] sm:$0xf]
    %v1936 = vld [vmem:[%s1906 + $0x74] sm:$0xf]
    %v1937 = vld [vmem:[%s1906 + $0x78] sm:$0xf]
    %v1938 = vld [vmem:[%s1906 + $0x7c] sm:$0xf]
    %v1939 = vld [vmem:[%s1906 + $0x80] sm:$0xf]
    %v1940 = vld [vmem:[%s1906 + $0x84] sm:$0xf]
    %v1941 = vld [vmem:[%s1906 + $0x88] sm:$0xf]
    %v1942 = vld [vmem:[%s1906 + $0x8c] sm:$0xf]
    %v1943 = vld [vmem:[%s1906 + $0x90] sm:$0xf]
    %v1944 = vld [vmem:[%s1906 + $0x94] sm:$0xf]
    %v1945 = vld [vmem:[%s1906 + $0x98] sm:$0xf]
    %v1946 = vld [vmem:[%s1906 + $0x9c] sm:$0xf]
    %v1947 = vld [vmem:[%s1906 + $0xa0] sm:$0xf]
    %v1948 = vld [vmem:[%s1906 + $0xa4] sm:$0xf]
    %v1949 = vld [vmem:[%s1906 + $0xa8] sm:$0xf]
    %v1950 = vld [vmem:[%s1906 + $0xac] sm:$0xf]
    %v1951 = vld [vmem:[%s1906 + $0xb0] sm:$0xf]
    %v1952 = vld [vmem:[%s1906 + $0xb4] sm:$0xf]
    %v1953 = vld [vmem:[%s1906 + $0xb8] sm:$0xf]
    %v1954 = vld [vmem:[%s1906 + $0xbc] sm:$0xf]
    %v1955 = vld [vmem:[%s1906 + $0xc0] sm:$0xf]
    %v1956 = vld [vmem:[%s1906 + $0xc4] sm:$0xf]
    %v1957 = vld [vmem:[%s1906 + $0xc8] sm:$0xf]
    %v1958 = vld [vmem:[%s1906 + $0xcc] sm:$0xf]
    %v1959 = vld [vmem:[%s1906 + $0xd0] sm:$0xf]
    %v1960 = vld [vmem:[%s1906 + $0xd4] sm:$0xf]
    %v1961 = vld [vmem:[%s1906 + $0xd8] sm:$0xf]
    %v1962 = vld [vmem:[%s1906 + $0xdc] sm:$0xf]
    %v1963 = vld [vmem:[%s1906 + $0xe0] sm:$0xf]
    %v1964 = vld [vmem:[%s1906 + $0xe4] sm:$0xf]
    %v1965 = vld [vmem:[%s1906 + $0xe8] sm:$0xf]
    %v1966 = vld [vmem:[%s1906 + $0xec] sm:$0xf]
    %v1967 = vld [vmem:[%s1906 + $0xf0] sm:$0xf]
    %v1968 = vld [vmem:[%s1906 + $0xf4] sm:$0xf]
    %v1969 = vld [vmem:[%s1906 + $0xf8] sm:$0xf]
    %v1970 = vld [vmem:[%s1906 + $0xfc] sm:$0xf]
    %v1971 = vld [vmem:[%s1906 + $0x100] sm:$0xf]
    %v1972 = vld [vmem:[%s1906 + $0x104] sm:$0xf]
    %v1973 = vld [vmem:[%s1906 + $0x108] sm:$0xf]
    %v1974 = vld [vmem:[%s1906 + $0x10c] sm:$0xf]
    %v1975 = vld [vmem:[%s1906 + $0x110] sm:$0xf]
    %v1976 = vld [vmem:[%s1906 + $0x114] sm:$0xf]
    %v1977 = vld [vmem:[%s1906 + $0x118] sm:$0xf]
    %v1978 = vld [vmem:[%s1906 + $0x11c] sm:$0xf]
    %v1979 = vld [vmem:[%s1906 + $0x120] sm:$0xf]
    %v1980 = vld [vmem:[%s1906 + $0x124] sm:$0xf]
    %v1981 = vld [vmem:[%s1906 + $0x128] sm:$0xf]
    %v1982 = vld [vmem:[%s1906 + $0x12c] sm:$0xf]
    %v1983 = vld [vmem:[%s1906 + $0x130] sm:$0xf]
    %v1984 = vld [vmem:[%s1906 + $0x134] sm:$0xf]
    %v1985 = vld [vmem:[%s1906 + $0x138] sm:$0xf]
    %v1986 = vld [vmem:[%s1906 + $0x13c] sm:$0xf]
    %v1987 = vld [vmem:[%s1906 + $0x140] sm:$0xf]
    %v1988 = vld [vmem:[%s1906 + $0x144] sm:$0xf]
    %v1989 = vld [vmem:[%s1906 + $0x148] sm:$0xf]
    %v1990 = vld [vmem:[%s1906 + $0x14c] sm:$0xf]
    %v1991 = vld [vmem:[%s1906 + $0x150] sm:$0xf]
    %v1992 = vld [vmem:[%s1906 + $0x154] sm:$0xf]
    %v1993 = vld [vmem:[%s1906 + $0x158] sm:$0xf]
    %v1994 = vld [vmem:[%s1906 + $0x15c] sm:$0xf]
    %v1995 = vld [vmem:[%s1906 + $0x160] sm:$0xf]
    %v1996 = vld [vmem:[%s1906 + $0x164] sm:$0xf]
    %v1997 = vld [vmem:[%s1906 + $0x168] sm:$0xf]
    %v1998 = vld [vmem:[%s1906 + $0x16c] sm:$0xf]
    %v1999 = vld [vmem:[%s1906 + $0x170] sm:$0xf]
    %v2000 = vld [vmem:[%s1906 + $0x174] sm:$0xf]
    %v2001 = vld [vmem:[%s1906 + $0x178] sm:$0xf]
    %v2002 = vld [vmem:[%s1906 + $0x17c] sm:$0xf]
    %v2003 = vld [vmem:[%s1906 + $0x180] sm:$0xf]
    %v2004 = vld [vmem:[%s1906 + $0x184] sm:$0xf]
    %v2005 = vld [vmem:[%s1906 + $0x188] sm:$0xf]
    %v2006 = vld [vmem:[%s1906 + $0x18c] sm:$0xf]
    %v2007 = vld [vmem:[%s1906 + $0x190] sm:$0xf]
    %v2008 = vld [vmem:[%s1906 + $0x194] sm:$0xf]
    %v2009 = vld [vmem:[%s1906 + $0x198] sm:$0xf]
    %v2010 = vld [vmem:[%s1906 + $0x19c] sm:$0xf]
    %v2011 = vld [vmem:[%s1906 + $0x1a0] sm:$0xf]
    %v2012 = vld [vmem:[%s1906 + $0x1a4] sm:$0xf]
    %v2013 = vld [vmem:[%s1906 + $0x1a8] sm:$0xf]
    %v2014 = vld [vmem:[%s1906 + $0x1ac] sm:$0xf]
    %v2015 = vld [vmem:[%s1906 + $0x1b0] sm:$0xf]
    %v2016 = vld [vmem:[%s1906 + $0x1b4] sm:$0xf]
    %v2017 = vld [vmem:[%s1906 + $0x1b8] sm:$0xf]
    %v2018 = vld [vmem:[%s1906 + $0x1bc] sm:$0xf]
    %v2019 = vld [vmem:[%s1906 + $0x1c0] sm:$0xf]
    %v2020 = vld [vmem:[%s1906 + $0x1c4] sm:$0xf]
    %v2021 = vld [vmem:[%s1906 + $0x1c8] sm:$0xf]
    %v2022 = vld [vmem:[%s1906 + $0x1cc] sm:$0xf]
    %v2023 = vld [vmem:[%s1906 + $0x1d0] sm:$0xf]
    %v2024 = vld [vmem:[%s1906 + $0x1d4] sm:$0xf]
    %v2025 = vld [vmem:[%s1906 + $0x1d8] sm:$0xf]
    %v2026 = vld [vmem:[%s1906 + $0x1dc] sm:$0xf]
    %v2027 = vld [vmem:[%s1906 + $0x1e0] sm:$0xf]
    %v2028 = vld [vmem:[%s1906 + $0x1e4] sm:$0xf]
    %v2029 = vld [vmem:[%s1906 + $0x1e8] sm:$0xf]
    %v2030 = vld [vmem:[%s1906 + $0x1ec] sm:$0xf]
    %v2031 = vld [vmem:[%s1906 + $0x1f0] sm:$0xf]
    %v2032 = vld [vmem:[%s1906 + $0x1f4] sm:$0xf]
    %v2033 = vld [vmem:[%s1906 + $0x1f8] sm:$0xf]
    %v2034 = vld [vmem:[%s1906 + $0x1fc] sm:$0xf]
    %v2163 = vunpack.c.l.b16 %v1907
    %v2164 = vunpack.c.l.b16 %v1908
    %v2165 = vunpack.c.l.b16 %v1909
    %v2166 = vunpack.c.l.b16 %v1910
    %v2167 = vunpack.c.l.b16 %v1911
    %v2168 = vunpack.c.l.b16 %v1912
    %v2169 = vunpack.c.l.b16 %v1913
    %v2170 = vunpack.c.l.b16 %v1914
    %v2171 = vunpack.c.l.b16 %v1915
    %v2172 = vunpack.c.l.b16 %v1916
    %v2173 = vunpack.c.l.b16 %v1917
    %v2174 = vunpack.c.l.b16 %v1918
    %v2175 = vunpack.c.l.b16 %v1919
    %v2176 = vunpack.c.l.b16 %v1920
    %v2177 = vunpack.c.l.b16 %v1921
    %v2178 = vunpack.c.l.b16 %v1922
    %v2179 = vunpack.c.l.b16 %v1923
    %v2180 = vunpack.c.l.b16 %v1924
    %v2181 = vunpack.c.l.b16 %v1925
    %v2182 = vunpack.c.l.b16 %v1926
    %v2183 = vunpack.c.l.b16 %v1927
    %v2184 = vunpack.c.l.b16 %v1928
    %v2185 = vunpack.c.l.b16 %v1929
    %v2186 = vunpack.c.l.b16 %v1930
    %v2187 = vunpack.c.l.b16 %v1931
    %v2188 = vunpack.c.l.b16 %v1932
    %v2189 = vunpack.c.l.b16 %v1933
    %v2190 = vunpack.c.l.b16 %v1934
    %v2191 = vunpack.c.l.b16 %v1935
    %v2192 = vunpack.c.l.b16 %v1936
    %v2193 = vunpack.c.l.b16 %v1937
    %v2194 = vunpack.c.l.b16 %v1938
    %v2195 = vunpack.c.l.b16 %v1939
    %v2196 = vunpack.c.l.b16 %v1940
    %v2197 = vunpack.c.l.b16 %v1941
    %v2198 = vunpack.c.l.b16 %v1942
    %v2199 = vunpack.c.l.b16 %v1943
    %v2200 = vunpack.c.l.b16 %v1944
    %v2201 = vunpack.c.l.b16 %v1945
    %v2202 = vunpack.c.l.b16 %v1946
    %v2203 = vunpack.c.l.b16 %v1947
    %v2204 = vunpack.c.l.b16 %v1948
    %v2205 = vunpack.c.l.b16 %v1949
    %v2206 = vunpack.c.l.b16 %v1950
    %v2207 = vunpack.c.l.b16 %v1951
    %v2208 = vunpack.c.l.b16 %v1952
    %v2209 = vunpack.c.l.b16 %v1953
    %v2210 = vunpack.c.l.b16 %v1954
    %v2211 = vunpack.c.l.b16 %v1955
    %v2212 = vunpack.c.l.b16 %v1956
    %v2213 = vunpack.c.l.b16 %v1957
    %v2214 = vunpack.c.l.b16 %v1958
    %v2215 = vunpack.c.l.b16 %v1959
    %v2216 = vunpack.c.l.b16 %v1960
    %v2217 = vunpack.c.l.b16 %v1961
    %v2218 = vunpack.c.l.b16 %v1962
    %v2219 = vunpack.c.l.b16 %v1963
    %v2220 = vunpack.c.l.b16 %v1964
    %v2221 = vunpack.c.l.b16 %v1965
    %v2222 = vunpack.c.l.b16 %v1966
    %v2223 = vunpack.c.l.b16 %v1967
    %v2224 = vunpack.c.l.b16 %v1968
    %v2225 = vunpack.c.l.b16 %v1969
    %v2226 = vunpack.c.l.b16 %v1970
    %v2227 = vunpack.c.l.b16 %v1971
    %v2228 = vunpack.c.l.b16 %v1972
    %v2229 = vunpack.c.l.b16 %v1973
    %v2230 = vunpack.c.l.b16 %v1974
    %v2231 = vunpack.c.l.b16 %v1975
    %v2232 = vunpack.c.l.b16 %v1976
    %v2233 = vunpack.c.l.b16 %v1977
    %v2234 = vunpack.c.l.b16 %v1978
    %v2235 = vunpack.c.l.b16 %v1979
    %v2236 = vunpack.c.l.b16 %v1980
    %v2237 = vunpack.c.l.b16 %v1981
    %v2238 = vunpack.c.l.b16 %v1982
    %v2239 = vunpack.c.l.b16 %v1983
    %v2240 = vunpack.c.l.b16 %v1984
    %v2241 = vunpack.c.l.b16 %v1985
    %v2242 = vunpack.c.l.b16 %v1986
    %v2243 = vunpack.c.l.b16 %v1987
    %v2244 = vunpack.c.l.b16 %v1988
    %v2245 = vunpack.c.l.b16 %v1989
    %v2246 = vunpack.c.l.b16 %v1990
    %v2247 = vunpack.c.l.b16 %v1991
    %v2248 = vunpack.c.l.b16 %v1992
    %v2249 = vunpack.c.l.b16 %v1993
    %v2250 = vunpack.c.l.b16 %v1994
    %v2251 = vunpack.c.l.b16 %v1995
    %v2252 = vunpack.c.l.b16 %v1996
    %v2253 = vunpack.c.l.b16 %v1997
    %v2254 = vunpack.c.l.b16 %v1998
    %v2255 = vunpack.c.l.b16 %v1999
    %v2256 = vunpack.c.l.b16 %v2000
    %v2257 = vunpack.c.l.b16 %v2001
    %v2258 = vunpack.c.l.b16 %v2002
    %v2259 = vunpack.c.l.b16 %v2003
    %v2260 = vunpack.c.l.b16 %v2004
    %v2261 = vunpack.c.l.b16 %v2005
    %v2262 = vunpack.c.l.b16 %v2006
    %v2263 = vunpack.c.l.b16 %v2007
    %v2264 = vunpack.c.l.b16 %v2008
    %v2265 = vunpack.c.l.b16 %v2009
    %v2266 = vunpack.c.l.b16 %v2010
    %v2267 = vunpack.c.l.b16 %v2011
    %v2268 = vunpack.c.l.b16 %v2012
    %v2269 = vunpack.c.l.b16 %v2013
    %v2270 = vunpack.c.l.b16 %v2014
    %v2271 = vunpack.c.l.b16 %v2015
    %v2272 = vunpack.c.l.b16 %v2016
    %v2273 = vunpack.c.l.b16 %v2017
    %v2274 = vunpack.c.l.b16 %v2018
    %v2275 = vunpack.c.l.b16 %v2019
    %v2276 = vunpack.c.l.b16 %v2020
    %v2277 = vunpack.c.l.b16 %v2021
    %v2278 = vunpack.c.l.b16 %v2022
    %v2279 = vunpack.c.l.b16 %v2023
    %v2280 = vunpack.c.l.b16 %v2024
    %v2281 = vunpack.c.l.b16 %v2025
    %v2282 = vunpack.c.l.b16 %v2026
    %v2283 = vunpack.c.l.b16 %v2027
    %v2284 = vunpack.c.l.b16 %v2028
    %v2285 = vunpack.c.l.b16 %v2029
    %v2286 = vunpack.c.l.b16 %v2030
    %v2287 = vunpack.c.l.b16 %v2031
    %v2288 = vunpack.c.l.b16 %v2032
    %v2289 = vunpack.c.l.b16 %v2033
    %v2290 = vunpack.c.l.b16 %v2034
    %v2291 = vpack.c.b16 %v2164, %v2163
    %v2292 = vpack.c.b16 %v2166, %v2165
    %v2293 = vpack.c.b16 %v2168, %v2167
    %v2294 = vpack.c.b16 %v2170, %v2169
    %v2295 = vpack.c.b16 %v2172, %v2171
    %v2296 = vpack.c.b16 %v2174, %v2173
    %v2297 = vpack.c.b16 %v2176, %v2175
    %v2298 = vpack.c.b16 %v2178, %v2177
    %v2299 = vpack.c.b16 %v2180, %v2179
    %v2300 = vpack.c.b16 %v2182, %v2181
    %v2301 = vpack.c.b16 %v2184, %v2183
    %v2302 = vpack.c.b16 %v2186, %v2185
    %v2303 = vpack.c.b16 %v2188, %v2187
    %v2304 = vpack.c.b16 %v2190, %v2189
    %v2305 = vpack.c.b16 %v2192, %v2191
    %v2306 = vpack.c.b16 %v2194, %v2193
    %v2307 = vpack.c.b16 %v2196, %v2195
    %v2308 = vpack.c.b16 %v2198, %v2197
    %v2309 = vpack.c.b16 %v2200, %v2199
    %v2310 = vpack.c.b16 %v2202, %v2201
    %v2311 = vpack.c.b16 %v2204, %v2203
    %v2312 = vpack.c.b16 %v2206, %v2205
    %v2313 = vpack.c.b16 %v2208, %v2207
    %v2314 = vpack.c.b16 %v2210, %v2209
    %v2315 = vpack.c.b16 %v2212, %v2211
    %v2316 = vpack.c.b16 %v2214, %v2213
    %v2317 = vpack.c.b16 %v2216, %v2215
    %v2318 = vpack.c.b16 %v2218, %v2217
    %v2319 = vpack.c.b16 %v2220, %v2219
    %v2320 = vpack.c.b16 %v2222, %v2221
    %v2321 = vpack.c.b16 %v2224, %v2223
    %v2322 = vpack.c.b16 %v2226, %v2225
    %v2323 = vpack.c.b16 %v2228, %v2227
    %v2324 = vpack.c.b16 %v2230, %v2229
    %v2325 = vpack.c.b16 %v2232, %v2231
    %v2326 = vpack.c.b16 %v2234, %v2233
    %v2327 = vpack.c.b16 %v2236, %v2235
    %v2328 = vpack.c.b16 %v2238, %v2237
    %v2329 = vpack.c.b16 %v2240, %v2239
    %v2330 = vpack.c.b16 %v2242, %v2241
    %v2331 = vpack.c.b16 %v2244, %v2243
    %v2332 = vpack.c.b16 %v2246, %v2245
    %v2333 = vpack.c.b16 %v2248, %v2247
    %v2334 = vpack.c.b16 %v2250, %v2249
    %v2335 = vpack.c.b16 %v2252, %v2251
    %v2336 = vpack.c.b16 %v2254, %v2253
    %v2337 = vpack.c.b16 %v2256, %v2255
    %v2338 = vpack.c.b16 %v2258, %v2257
    %v2339 = vpack.c.b16 %v2260, %v2259
    %v2340 = vpack.c.b16 %v2262, %v2261
    %v2341 = vpack.c.b16 %v2264, %v2263
    %v2342 = vpack.c.b16 %v2266, %v2265
    %v2343 = vpack.c.b16 %v2268, %v2267
    %v2344 = vpack.c.b16 %v2270, %v2269
    %v2345 = vpack.c.b16 %v2272, %v2271
    %v2346 = vpack.c.b16 %v2274, %v2273
    %v2347 = vpack.c.b16 %v2276, %v2275
    %v2348 = vpack.c.b16 %v2278, %v2277
    %v2349 = vpack.c.b16 %v2280, %v2279
    %v2350 = vpack.c.b16 %v2282, %v2281
    %v2351 = vpack.c.b16 %v2284, %v2283
    %v2352 = vpack.c.b16 %v2286, %v2285
    %v2353 = vpack.c.b16 %v2288, %v2287
    %v2354 = vpack.c.b16 %v2290, %v2289
    %2419 = vmatpush.bf16.msra.mxu0 %v2298
    %2420 = vmatpush.bf16.msra.mxu0 %v2297
    %2421 = vmatpush.bf16.msra.mxu0 %v2296
    %2422 = vmatpush.bf16.msra.mxu0 %v2295
    %2423 = vmatpush.bf16.msra.mxu0 %v2294
    %2424 = vmatpush.bf16.msra.mxu0 %v2293
    %2425 = vmatpush.bf16.msra.mxu0 %v2292
    %2426 = vmatpush.bf16.msra.mxu0 %v2291
    %2427 = vmatmul.bf16.gmra.mxu0 %v1898
    %v2428 = vpop.f32.mrf.mxu0
    %v2429 = vadd.f32 0.0, %v2428
    %v2430 = vpop.f32.mrf.mxu0
    %2431 = vdwg.mxu0
    %2432 = vmatpush.bf16.msra.mxu0 %v2306
    %2433 = vmatpush.bf16.msra.mxu0 %v2305
    %2434 = vmatpush.bf16.msra.mxu0 %v2304
    %2435 = vmatpush.bf16.msra.mxu0 %v2303
    %2436 = vmatpush.bf16.msra.mxu0 %v2302
    %2437 = vmatpush.bf16.msra.mxu0 %v2301
    %2438 = vmatpush.bf16.msra.mxu0 %v2300
    %2439 = vmatpush.bf16.msra.mxu0 %v2299
    %2440 = vmatmul.bf16.gmra.mxu0 %v1899
    %v2441 = vpop.f32.mrf.mxu0
    %v2442 = vadd.f32 %v2429, %v2441
    %v2443 = vpop.f32.mrf.mxu0
    %2444 = vdwg.mxu0
    %2445 = vmatpush.bf16.msra.mxu0 %v2314
    %2446 = vmatpush.bf16.msra.mxu0 %v2313
    %2447 = vmatpush.bf16.msra.mxu0 %v2312
    %2448 = vmatpush.bf16.msra.mxu0 %v2311
    %2449 = vmatpush.bf16.msra.mxu0 %v2310
    %2450 = vmatpush.bf16.msra.mxu0 %v2309
    %2451 = vmatpush.bf16.msra.mxu0 %v2308
    %2452 = vmatpush.bf16.msra.mxu0 %v2307
    %2453 = vmatmul.bf16.gmra.mxu0 %v1900
    %v2454 = vpop.f32.mrf.mxu0
    %v2455 = vadd.f32 %v2442, %v2454
    %v2456 = vpop.f32.mrf.mxu0
    %2457 = vdwg.mxu0
    %2458 = vmatpush.bf16.msra.mxu0 %v2322
    %2459 = vmatpush.bf16.msra.mxu0 %v2321
    %2460 = vmatpush.bf16.msra.mxu0 %v2320
    %2461 = vmatpush.bf16.msra.mxu0 %v2319
    %2462 = vmatpush.bf16.msra.mxu0 %v2318
    %2463 = vmatpush.bf16.msra.mxu0 %v2317
    %2464 = vmatpush.bf16.msra.mxu0 %v2316
    %2465 = vmatpush.bf16.msra.mxu0 %v2315
    %2466 = vmatmul.bf16.gmra.mxu0 %v1901
    %v2467 = vpop.f32.mrf.mxu0
    %v2468 = vadd.f32 %v2455, %v2467
    %v2469 = vpop.f32.mrf.mxu0
    %2470 = vdwg.mxu0
    %2471 = vmatpush.bf16.msra.mxu0 %v2330
    %2472 = vmatpush.bf16.msra.mxu0 %v2329
    %2473 = vmatpush.bf16.msra.mxu0 %v2328
    %2474 = vmatpush.bf16.msra.mxu0 %v2327
    %2475 = vmatpush.bf16.msra.mxu0 %v2326
    %2476 = vmatpush.bf16.msra.mxu0 %v2325
    %2477 = vmatpush.bf16.msra.mxu0 %v2324
    %2478 = vmatpush.bf16.msra.mxu0 %v2323
    %2479 = vmatmul.bf16.gmra.mxu0 %v1902
    %v2480 = vpop.f32.mrf.mxu0
    %v2481 = vadd.f32 %v2468, %v2480
    %v2482 = vpop.f32.mrf.mxu0
    %2483 = vdwg.mxu0
    %2484 = vmatpush.bf16.msra.mxu0 %v2338
    %2485 = vmatpush.bf16.msra.mxu0 %v2337
    %2486 = vmatpush.bf16.msra.mxu0 %v2336
    %2487 = vmatpush.bf16.msra.mxu0 %v2335
    %2488 = vmatpush.bf16.msra.mxu0 %v2334
    %2489 = vmatpush.bf16.msra.mxu0 %v2333
    %2490 = vmatpush.bf16.msra.mxu0 %v2332
    %2491 = vmatpush.bf16.msra.mxu0 %v2331
    %2492 = vmatmul.bf16.gmra.mxu0 %v1903
    %v2493 = vpop.f32.mrf.mxu0
    %v2494 = vadd.f32 %v2481, %v2493
    %v2495 = vpop.f32.mrf.mxu0
    %2496 = vdwg.mxu0
    %2497 = vmatpush.bf16.msra.mxu0 %v2346
    %2498 = vmatpush.bf16.msra.mxu0 %v2345
    %2499 = vmatpush.bf16.msra.mxu0 %v2344
    %2500 = vmatpush.bf16.msra.mxu0 %v2343
    %2501 = vmatpush.bf16.msra.mxu0 %v2342
    %2502 = vmatpush.bf16.msra.mxu0 %v2341
    %2503 = vmatpush.bf16.msra.mxu0 %v2340
    %2504 = vmatpush.bf16.msra.mxu0 %v2339
    %2505 = vmatmul.bf16.gmra.mxu0 %v1904
    %v2506 = vpop.f32.mrf.mxu0
    %v2507 = vadd.f32 %v2494, %v2506
    %v2508 = vpop.f32.mrf.mxu0
    %2509 = vdwg.mxu0
    %2510 = vmatpush.bf16.msra.mxu0 %v2354
    %2511 = vmatpush.bf16.msra.mxu0 %v2353
    %2512 = vmatpush.bf16.msra.mxu0 %v2352
    %2513 = vmatpush.bf16.msra.mxu0 %v2351
    %2514 = vmatpush.bf16.msra.mxu0 %v2350
    %2515 = vmatpush.bf16.msra.mxu0 %v2349
    %2516 = vmatpush.bf16.msra.mxu0 %v2348
    %2517 = vmatpush.bf16.msra.mxu0 %v2347
    %2518 = vmatmul.bf16.gmra.mxu0 %v1905
    %v2519 = vpop.f32.mrf.mxu0
    %v2520 = vadd.f32 %v2507, %v2519
    %v2521 = vpop.f32.mrf.mxu0
    %2522 = vdwg.mxu0
    %v2523 = vadd.f32 %v1693, %v2520
    %v2524 = vld [vmem:[%s4] sm:$0x1]
    %v2526 = vperm.slane %v2524, 0
    %v2528 = vadd.f32 %v2523, %v2526
    %v2529 = vmax.f32 %v2528, 0.0
    %v2530 = vpack.c.bf16 %v2529, %v2529
    %v2531 = vld [vmem:[%s5] sm:$0xf]
    %v2532 = vld [vmem:[%s5 + $0x4] sm:$0xf]
    %v2533 = vld [vmem:[%s5 + $0x8] sm:$0xf]
    %v2534 = vld [vmem:[%s5 + $0xc] sm:$0xf]
    %v2535 = vld [vmem:[%s5 + $0x10] sm:$0xf]
    %v2536 = vld [vmem:[%s5 + $0x14] sm:$0xf]
    %v2537 = vld [vmem:[%s5 + $0x18] sm:$0xf]
    %v2538 = vld [vmem:[%s5 + $0x1c] sm:$0xf]
    %v2539 = vld [vmem:[%s5 + $0x20] sm:$0xf]
    %v2540 = vld [vmem:[%s5 + $0x24] sm:$0xf]
    %v2541 = vld [vmem:[%s5 + $0x28] sm:$0xf]
    %v2542 = vld [vmem:[%s5 + $0x2c] sm:$0xf]
    %v2543 = vld [vmem:[%s5 + $0x30] sm:$0xf]
    %v2544 = vld [vmem:[%s5 + $0x34] sm:$0xf]
    %v2545 = vld [vmem:[%s5 + $0x38] sm:$0xf]
    %v2546 = vld [vmem:[%s5 + $0x3c] sm:$0xf]
    %v2547 = vld [vmem:[%s6] sm:$0x1]
    %v2549 = vperm.slane %v2547, 0
    %v2567 = vunpack.c.l.b16 %v2531
    %v2568 = vunpack.c.l.b16 %v2532
    %v2569 = vunpack.c.l.b16 %v2533
    %v2570 = vunpack.c.l.b16 %v2534
    %v2571 = vunpack.c.l.b16 %v2535
    %v2572 = vunpack.c.l.b16 %v2536
    %v2573 = vunpack.c.l.b16 %v2537
    %v2574 = vunpack.c.l.b16 %v2538
    %v2575 = vunpack.c.l.b16 %v2539
    %v2576 = vunpack.c.l.b16 %v2540
    %v2577 = vunpack.c.l.b16 %v2541
    %v2578 = vunpack.c.l.b16 %v2542
    %v2579 = vunpack.c.l.b16 %v2543
    %v2580 = vunpack.c.l.b16 %v2544
    %v2581 = vunpack.c.l.b16 %v2545
    %v2582 = vunpack.c.l.b16 %v2546
    %v2583 = vpack.c.b16 %v2568, %v2567
    %v2584 = vpack.c.b16 %v2570, %v2569
    %v2585 = vpack.c.b16 %v2572, %v2571
    %v2586 = vpack.c.b16 %v2574, %v2573
    %v2587 = vpack.c.b16 %v2576, %v2575
    %v2588 = vpack.c.b16 %v2578, %v2577
    %v2589 = vpack.c.b16 %v2580, %v2579
    %v2590 = vpack.c.b16 %v2582, %v2581
    %2599 = vmatpush.bf16.msra.mxu0 %v2590
    %2600 = vmatpush.bf16.msra.mxu0 %v2589
    %2601 = vmatpush.bf16.msra.mxu0 %v2588
    %2602 = vmatpush.bf16.msra.mxu0 %v2587
    %2603 = vmatpush.bf16.msra.mxu0 %v2586
    %2604 = vmatpush.bf16.msra.mxu0 %v2585
    %2605 = vmatpush.bf16.msra.mxu0 %v2584
    %2606 = vmatpush.bf16.msra.mxu0 %v2583
    %2607 = vmatmul.bf16.gmra.mxu0 %v2530
    %v2608 = vpop.f32.mrf.mxu0
    %v2609 = vadd.f32 %v2549, %v2608
    %v2610 = vpop.f32.mrf.mxu0
    %2611 = vdwg.mxu0
    %vm2612 = vcmask 33792
    %v2613 = vsel %vm2612, %v2609, -inf
    %2614 = vmax.xlane.f32.xlu0 %v2613
    %v2615 = vpop.xlane.xlu0 %2614
    %v2616 = vsub.f32 %v2609, %v2615
    %v2617 = vmul.f32 %v2616, 1.442695
    %v2618 = vpow.pop %v2617
    %v2619 = vsel %vm2612, %v2618, 0.0
    %2620 = vadd.xlane.f32.xlu0 %v2619
    %v2621 = vpop.xlane.xlu0 %2620
    %v2622 = vrcp.pop %v2621
    %v2623 = vmul.f32 %v2618, %v2622
    %2624 = vst.msk [vmem:[#allocation5] sm:$0x3] %vm2612, %v2623
    // Predicated region
    $region34: #{actor_forward.1} parent=1 // pred_check
      _
    $region35: #{actor_forward.1} parent=1 // pred_check_branch
      %2626 = sbr.rel (0) target = $region37
    $region36: #{actor_forward.1} parent=1 // pred_region
      %2628 = vsyncadd [#allocation4], 0
      %s2630 = sshll.u32 [#allocation5], 4
      %s2631 = int_to_ptr.vmem [resolvable:$true] %s2630
      %s2632 = sshll.u32 %s7, 4
      %s2633 = int_to_ptr.hbm [resolvable:$true] %s2632
      %2635 = dma.vmem_to_hbm [thread:$0]  %s2631, 32, %s2633, [#allocation4]
    $region37: #{actor_forward.1} parent=1 // pred_fallthru
      _
    // Predicated region
    $region38: #{actor_forward.1} parent=1 // pred_check
      _
    $region39: #{actor_forward.1} parent=1 // pred_check_branch
      %2637 = sbr.rel (0) target = $region41
    $region40: #{actor_forward.1} parent=1 // pred_region
      %2639 = dma.done [#allocation4], 32
    $region41: #{actor_forward.1} parent=1 // pred_fallthru
      _
    %2640 = vsyncpa [#allocation3], 1
    %2641 = vsyncpa [#allocation4], 1

</llo_original>
